<compile_context>
chip_gen: v6e
topology: v6e:2x2x1
jax: 0.10.0
libtpu: 0.0.40
codegen_flags: <defaults>
</compile_context>

<pallas_src>
import functools

import jax
import jax.numpy as jnp
from jax.experimental import pallas as pl
from jax.experimental.pallas import tpu as pltpu


def coupling_fused_kernel(x_ref, mask_ref,
                          w1_ref, b1_ref, w2_ref, b2_ref, w3_ref, b3_ref,
                          y_ref, ld_ref, *, H, D):
    x = x_ref[...]                        # (TB, D) f32
    mask = mask_ref[...]                  # (1, D)  f32
    inv_mask = 1.0 - mask
    mm_dtype = w1_ref.dtype               # bf16 (or f32 for validation)

    xm = (x * mask).astype(mm_dtype)      # masked inputs, matmul operand dtype

    # --- fused layer 1: (TB, D) @ (D, 2H) ---------------------------------
    z1 = jnp.dot(xm, w1_ref[...],
                 preferred_element_type=jnp.float32) + b1_ref[...]
    # lanes [0:H) -> scale net (tanh), lanes [H:2H) -> translate net (relu)
    h1 = jnp.concatenate(
        [jnp.tanh(z1[:, :H]), jnp.maximum(z1[:, H:], 0.0)], axis=-1)

    # --- fused layer 2: (TB, 2H) @ block-diag(2H, 2H) ----------------------
    z2 = jnp.dot(h1.astype(mm_dtype), w2_ref[...],
                 preferred_element_type=jnp.float32) + b2_ref[...]
    h2 = jnp.concatenate(
        [jnp.tanh(z2[:, :H]), jnp.maximum(z2[:, H:], 0.0)], axis=-1)

    # --- fused layer 3: (TB, 2H) @ block-diag(2H, 2D) ----------------------
    z3 = jnp.dot(h2.astype(mm_dtype), w3_ref[...],
                 preferred_element_type=jnp.float32) + b3_ref[...]
    log_s = z3[:, :D] * inv_mask          # scale-net output
    t = z3[:, D:] * inv_mask              # translate-net output

    y_ref[...] = (x * jnp.exp(log_s) + t).astype(y_ref.dtype)
    # lane-dense logdet: one (1, TB) row per tile (batch along the lane axis)
    ld_ref[...] = jnp.sum(log_s, axis=-1)[None, :].astype(ld_ref.dtype)


def _round_up(a, m):
    return -(-a // m) * m


def coupling_layer_direct(x, mask, params, *, block_b=1024,
                          matmul_dtype=jnp.bfloat16):
    """Direct-mode forward of CouplingLayer. Returns (y, logdet)."""
    f32 = jnp.float32
    B, D = x.shape
    (w1s, b1s, w2s, b2s, w3s, b3s,
     w1t, b1t, w2t, b2t, w3t, b3t) = params
    H = w1s.shape[1]

    # ---- build fused weights once at trace time (VMEM-resident in-kernel) --
    w1 = jnp.concatenate([w1s, w1t], axis=1).astype(matmul_dtype)        # (D, 2H)
    b1 = jnp.concatenate([b1s, b1t]).reshape(1, 2 * H).astype(f32)
    zHH = jnp.zeros((H, H), f32)
    w2 = jnp.block([[w2s, zHH], [zHH, w2t]]).astype(matmul_dtype)        # (2H, 2H)
    b2 = jnp.concatenate([b2s, b2t]).reshape(1, 2 * H).astype(f32)
    zHD = jnp.zeros((H, D), f32)
    w3 = jnp.block([[w3s, zHD], [zHD, w3t]]).astype(matmul_dtype)        # (2H, 2D)
    b3 = jnp.concatenate([b3s, b3t]).reshape(1, 2 * D).astype(f32)

    mask2 = mask.reshape(1, D).astype(f32)

    # ---- batch tiling: TB a multiple of 128 (lane-dense logdet row), and ----
    # ---- capped so the grid has >= 2 steps when B allows it (v7x 2 TCs). ----
    block_b = max(128, _round_up(block_b, 128))
    TB = min(block_b, _round_up(B, 128))
    two_tile_cap = _round_up(-(-B // 2), 128)
    TB = max(128, min(TB, two_tile_cap))
    num_tiles = pl.cdiv(B, TB)
    B_pad = num_tiles * TB
    x_in = jnp.pad(x, ((0, B_pad - B), (0, 0))) if B_pad != B else x

    tile_map = lambda i: (i, 0)
    const_map = lambda i: (0, 0)
    full = lambda a: pl.BlockSpec(a.shape, const_map)   # VMEM-resident constant

    kernel = functools.partial(coupling_fused_kernel, H=H, D=D)

    y, ld_row = pl.pallas_call(
        kernel,
        out_shape=(
            jax.ShapeDtypeStruct((B_pad, D), x.dtype),
            jax.ShapeDtypeStruct((1, B_pad), jnp.float32),   # lane-dense logdet
        ),
        grid=(num_tiles,),
        in_specs=[
            pl.BlockSpec((TB, D), tile_map),   # x (streamed, double-buffered)
            full(mask2),
            full(w1), full(b1), full(w2), full(b2), full(w3), full(b3),
        ],
        out_specs=(
            pl.BlockSpec((TB, D), tile_map),
            pl.BlockSpec((1, TB), lambda i: (0, i)),
        ),
        compiler_params=pltpu.CompilerParams(
            dimension_semantics=("parallel",)),
    )(x_in, mask2, w1, b1, w2, b2, w3, b3)

    ld = ld_row.reshape(B_pad, 1)
    if B_pad != B:
        y, ld = y[:B], ld[:B]
    return y, ld


def init_params(key, num_inputs, num_hidden):
    """Deterministic Linear weights (stored as (in, out)) and zero biases."""
    D, H = num_inputs, num_hidden
    ks = jax.random.split(key, 6)

    def w(k, fan_in, fan_out):
        return (jax.random.normal(k, (fan_in, fan_out), dtype=jnp.float32)
                / jnp.sqrt(jnp.float32(fan_in)))

    w1s, w2s, w3s = w(ks[0], D, H), w(ks[1], H, H), w(ks[2], H, D)
    w1t, w2t, w3t = w(ks[3], D, H), w(ks[4], H, H), w(ks[5], H, D)
    zH = jnp.zeros((H,), jnp.float32)
    zD = jnp.zeros((D,), jnp.float32)
    return (w1s, zH, w2s, zH, w3s, zD,
            w1t, zH, w2t, zH, w3t, zD)


def reference(x, mask, params):
    (w1s, b1s, w2s, b2s, w3s, b3s,
     w1t, b1t, w2t, b2t, w3t, b3t) = params
    xm = x * mask
    h = jnp.tanh(xm @ w1s + b1s)
    h = jnp.tanh(h @ w2s + b2s)
    log_s = (h @ w3s + b3s) * (1.0 - mask)
    g = jax.nn.relu(xm @ w1t + b1t)
    g = jax.nn.relu(g @ w2t + b2t)
    t = (g @ w3t + b3t) * (1.0 - mask)
    y = x * jnp.exp(log_s) + t
    return y, jnp.sum(log_s, axis=-1, keepdims=True)


if __name__ == "__main__":
    B, D, H = 256, 32, 64
    key = jax.random.PRNGKey(0)
    kx, kw = jax.random.split(key)

    x = jax.random.normal(kx, (B, D), dtype=jnp.float32)
    mask = (jnp.arange(D) % 2).astype(jnp.float32)   # alternating RealNVP mask
    params = init_params(kw, D, H)

    y_ref, ld_ref = reference(x, mask, params)

    # 1) f32 matmul-operand path: validates the MLP fusion / masking /
    #    lane-dense logdet exactly against the f32 reference.
    y32, ld32 = coupling_layer_direct(x, mask, params, matmul_dtype=jnp.float32)
    jax.block_until_ready((y32, ld32))
    assert jnp.allclose(y32, y_ref, atol=1e-4, rtol=1e-4), "f32 output mismatch"
    assert jnp.allclose(ld32, ld_ref, atol=1e-4, rtol=1e-4), "f32 logdet mismatch"

    # 2) bf16 matmul-operand path (default / optimized): relaxed tolerance vs
    #    the f32 reference -- exp(log_s) amplifies matmul rounding.
    y, ld = coupling_layer_direct(x, mask, params)
    jax.block_until_ready((y, ld))
    assert jnp.allclose(y, y_ref, atol=5e-2, rtol=5e-2), "bf16 output mismatch"
    assert jnp.allclose(ld, ld_ref, atol=1e-1, rtol=5e-2), "bf16 logdet mismatch"

    print("KERNEL_OK")
</pallas_src>

<mosaic_0001>
module attributes {stable_mosaic.version = 11 : i64} {
  func.func @coupling_fused_kernel(%arg0: i32, %arg1: memref<128x32xf32, #tpu.memory_space<vmem>>, %arg2: memref<1x32xf32, #tpu.memory_space<vmem>>, %arg3: memref<32x128xf32, #tpu.memory_space<vmem>>, %arg4: memref<1x128xf32, #tpu.memory_space<vmem>>, %arg5: memref<128x128xf32, #tpu.memory_space<vmem>>, %arg6: memref<1x128xf32, #tpu.memory_space<vmem>>, %arg7: memref<128x64xf32, #tpu.memory_space<vmem>>, %arg8: memref<1x64xf32, #tpu.memory_space<vmem>>, %arg9: memref<128x32xf32, #tpu.memory_space<vmem>>, %arg10: memref<1x128xf32, #tpu.memory_space<vmem>>) attributes {dimension_semantics = [#tpu.dimension_semantics<parallel>], iteration_bounds = array<i64: 2>, scalar_prefetch = 0 : i64, scratch_operands = 0 : i64, tpu.core_type = #tpu.core_type<tc>, window_params = [{transform_indices = @transform_0, window_bounds = array<i64: 128, 32>}, {pipeline_mode = #tpu.pipeline_mode<synchronous>, transform_indices = @transform_1, window_bounds = array<i64: 1, 32>}, {pipeline_mode = #tpu.pipeline_mode<synchronous>, transform_indices = @transform_2, window_bounds = array<i64: 32, 128>}, {pipeline_mode = #tpu.pipeline_mode<synchronous>, transform_indices = @transform_3, window_bounds = array<i64: 1, 128>}, {pipeline_mode = #tpu.pipeline_mode<synchronous>, transform_indices = @transform_4, window_bounds = array<i64: 128, 128>}, {pipeline_mode = #tpu.pipeline_mode<synchronous>, transform_indices = @transform_5, window_bounds = array<i64: 1, 128>}, {pipeline_mode = #tpu.pipeline_mode<synchronous>, transform_indices = @transform_6, window_bounds = array<i64: 128, 64>}, {pipeline_mode = #tpu.pipeline_mode<synchronous>, transform_indices = @transform_7, window_bounds = array<i64: 1, 64>}, {transform_indices = @transform_8, window_bounds = array<i64: 128, 32>}, {transform_indices = @transform_9, window_bounds = array<i64: 1, 128>}]} {
    %c0 = arith.constant 0 : index
    %c0_0 = arith.constant 0 : index
    %0 = vector.load %arg1[%c0, %c0_0] : memref<128x32xf32, #tpu.memory_space<vmem>>, vector<128x32xf32>
    %c0_1 = arith.constant 0 : index
    %c0_2 = arith.constant 0 : index
    %1 = vector.load %arg2[%c0_1, %c0_2] : memref<1x32xf32, #tpu.memory_space<vmem>>, vector<1x32xf32>
    %cst = arith.constant 1.000000e+00 : f32
    %2 = vector.broadcast %cst : f32 to vector<1x32xf32>
    %3 = arith.subf %2, %1 : vector<1x32xf32>
    %4 = vector.broadcast %1 : vector<1x32xf32> to vector<128x32xf32>
    %5 = arith.mulf %0, %4 : vector<128x32xf32>
    %c0_3 = arith.constant 0 : index
    %c0_4 = arith.constant 0 : index
    %6 = vector.load %arg3[%c0_3, %c0_4] : memref<32x128xf32, #tpu.memory_space<vmem>>, vector<32x128xf32>
    %cst_5 = arith.constant dense<0.000000e+00> : vector<128x128xf32>
    %7 = tpu.matmul %5, %6, %cst_5 {dimension_numbers = #tpu.dot_dimension_numbers<[1], [0], [0], [1], [0, 0, 1, 1], [], []>} : vector<128x32xf32>, vector<32x128xf32>, vector<128x128xf32> -> vector<128x128xf32>
    %c0_6 = arith.constant 0 : index
    %c0_7 = arith.constant 0 : index
    %8 = vector.load %arg4[%c0_6, %c0_7] : memref<1x128xf32, #tpu.memory_space<vmem>>, vector<1x128xf32>
    %9 = vector.broadcast %8 : vector<1x128xf32> to vector<128x128xf32>
    %10 = arith.addf %7, %9 : vector<128x128xf32>
    %11 = vector.extract_strided_slice %10 {offsets = [0, 0], sizes = [128, 64], strides = [1, 1]} : vector<128x128xf32> to vector<128x64xf32>
    %12 = math.tanh %11 : vector<128x64xf32>
    %13 = vector.extract_strided_slice %10 {offsets = [0, 64], sizes = [128, 64], strides = [1, 1]} : vector<128x128xf32> to vector<128x64xf32>
    %cst_8 = arith.constant 0.000000e+00 : f32
    %14 = vector.broadcast %cst_8 : f32 to vector<128x64xf32>
    %15 = arith.maximumf %13, %14 : vector<128x64xf32>
    %16 = tpu.concatenate %12, %15 in 1 : vector<128x64xf32>, vector<128x64xf32> -> vector<128x128xf32>
    %c0_9 = arith.constant 0 : index
    %c0_10 = arith.constant 0 : index
    %17 = vector.load %arg5[%c0_9, %c0_10] : memref<128x128xf32, #tpu.memory_space<vmem>>, vector<128x128xf32>
    %cst_11 = arith.constant dense<0.000000e+00> : vector<128x128xf32>
    %18 = tpu.matmul %16, %17, %cst_11 {dimension_numbers = #tpu.dot_dimension_numbers<[1], [0], [0], [1], [0, 0, 1, 1], [], []>} : vector<128x128xf32>, vector<128x128xf32>, vector<128x128xf32> -> vector<128x128xf32>
    %c0_12 = arith.constant 0 : index
    %c0_13 = arith.constant 0 : index
    %19 = vector.load %arg6[%c0_12, %c0_13] : memref<1x128xf32, #tpu.memory_space<vmem>>, vector<1x128xf32>
    %20 = vector.broadcast %19 : vector<1x128xf32> to vector<128x128xf32>
    %21 = arith.addf %18, %20 : vector<128x128xf32>
    %22 = vector.extract_strided_slice %21 {offsets = [0, 0], sizes = [128, 64], strides = [1, 1]} : vector<128x128xf32> to vector<128x64xf32>
    %23 = math.tanh %22 : vector<128x64xf32>
    %24 = vector.extract_strided_slice %21 {offsets = [0, 64], sizes = [128, 64], strides = [1, 1]} : vector<128x128xf32> to vector<128x64xf32>
    %cst_14 = arith.constant 0.000000e+00 : f32
    %25 = vector.broadcast %cst_14 : f32 to vector<128x64xf32>
    %26 = arith.maximumf %24, %25 : vector<128x64xf32>
    %27 = tpu.concatenate %23, %26 in 1 : vector<128x64xf32>, vector<128x64xf32> -> vector<128x128xf32>
    %c0_15 = arith.constant 0 : index
    %c0_16 = arith.constant 0 : index
    %28 = vector.load %arg7[%c0_15, %c0_16] : memref<128x64xf32, #tpu.memory_space<vmem>>, vector<128x64xf32>
    %cst_17 = arith.constant dense<0.000000e+00> : vector<128x64xf32>
    %29 = tpu.matmul %27, %28, %cst_17 {dimension_numbers = #tpu.dot_dimension_numbers<[1], [0], [0], [1], [0, 0, 1, 1], [], []>} : vector<128x128xf32>, vector<128x64xf32>, vector<128x64xf32> -> vector<128x64xf32>
    %c0_18 = arith.constant 0 : index
    %c0_19 = arith.constant 0 : index
    %30 = vector.load %arg8[%c0_18, %c0_19] : memref<1x64xf32, #tpu.memory_space<vmem>>, vector<1x64xf32>
    %31 = vector.broadcast %30 : vector<1x64xf32> to vector<128x64xf32>
    %32 = arith.addf %29, %31 : vector<128x64xf32>
    %33 = vector.extract_strided_slice %32 {offsets = [0, 0], sizes = [128, 32], strides = [1, 1]} : vector<128x64xf32> to vector<128x32xf32>
    %34 = vector.broadcast %3 : vector<1x32xf32> to vector<128x32xf32>
    %35 = arith.mulf %33, %34 : vector<128x32xf32>
    %36 = vector.extract_strided_slice %32 {offsets = [0, 32], sizes = [128, 32], strides = [1, 1]} : vector<128x64xf32> to vector<128x32xf32>
    %37 = vector.broadcast %3 : vector<1x32xf32> to vector<128x32xf32>
    %38 = arith.mulf %36, %37 : vector<128x32xf32>
    %39 = math.exp %35 : vector<128x32xf32>
    %40 = arith.mulf %0, %39 : vector<128x32xf32>
    %41 = arith.addf %40, %38 : vector<128x32xf32>
    %c0_20 = arith.constant 0 : index
    %c0_21 = arith.constant 0 : index
    %42 = vector.load %arg9[%c0_20, %c0_21] : memref<128x32xf32, #tpu.memory_space<vmem>>, vector<128x32xf32>
    tpu.vector_store %arg9[%c0_20, %c0_21], %41 {strides = array<i32>} : memref<128x32xf32, #tpu.memory_space<vmem>>, vector<128x32xf32>,
    %cst_22 = arith.constant dense<0.000000e+00> : vector<128xf32>
    %43 = vector.multi_reduction <add>, %35, %cst_22 [1] : vector<128x32xf32> to vector<128xf32>
    %44 = vector.shape_cast %43 : vector<128xf32> to vector<1x128xf32>
    %c0_23 = arith.constant 0 : index
    %c0_24 = arith.constant 0 : index
    %45 = vector.load %arg10[%c0_23, %c0_24] : memref<1x128xf32, #tpu.memory_space<vmem>>, vector<1x128xf32>
    tpu.vector_store %arg10[%c0_23, %c0_24], %44 {strides = array<i32>} : memref<1x128xf32, #tpu.memory_space<vmem>>, vector<1x128xf32>,
    return
  }
  func.func @transform_0(%arg0: i32) -> (i32, i32) {
    %c0_i32 = arith.constant 0 : i32
    %c0_i32_0 = arith.constant 0 : i32
    return %arg0, %c0_i32 : i32, i32
  }
  func.func @transform_1(%arg0: i32) -> (i32, i32) {
    %c0_i32 = arith.constant 0 : i32
    %c0_i32_0 = arith.constant 0 : i32
    %c0_i32_1 = arith.constant 0 : i32
    return %c0_i32, %c0_i32_0 : i32, i32
  }
  func.func @transform_2(%arg0: i32) -> (i32, i32) {
    %c0_i32 = arith.constant 0 : i32
    %c0_i32_0 = arith.constant 0 : i32
    %c0_i32_1 = arith.constant 0 : i32
    return %c0_i32, %c0_i32_0 : i32, i32
  }
  func.func @transform_3(%arg0: i32) -> (i32, i32) {
    %c0_i32 = arith.constant 0 : i32
    %c0_i32_0 = arith.constant 0 : i32
    %c0_i32_1 = arith.constant 0 : i32
    return %c0_i32, %c0_i32_0 : i32, i32
  }
  func.func @transform_4(%arg0: i32) -> (i32, i32) {
    %c0_i32 = arith.constant 0 : i32
    %c0_i32_0 = arith.constant 0 : i32
    %c0_i32_1 = arith.constant 0 : i32
    return %c0_i32, %c0_i32_0 : i32, i32
  }
  func.func @transform_5(%arg0: i32) -> (i32, i32) {
    %c0_i32 = arith.constant 0 : i32
    %c0_i32_0 = arith.constant 0 : i32
    %c0_i32_1 = arith.constant 0 : i32
    return %c0_i32, %c0_i32_0 : i32, i32
  }
  func.func @transform_6(%arg0: i32) -> (i32, i32) {
    %c0_i32 = arith.constant 0 : i32
    %c0_i32_0 = arith.constant 0 : i32
    %c0_i32_1 = arith.constant 0 : i32
    return %c0_i32, %c0_i32_0 : i32, i32
  }
  func.func @transform_7(%arg0: i32) -> (i32, i32) {
    %c0_i32 = arith.constant 0 : i32
    %c0_i32_0 = arith.constant 0 : i32
    %c0_i32_1 = arith.constant 0 : i32
    return %c0_i32, %c0_i32_0 : i32, i32
  }
  func.func @transform_8(%arg0: i32) -> (i32, i32) {
    %c0_i32 = arith.constant 0 : i32
    %c0_i32_0 = arith.constant 0 : i32
    return %arg0, %c0_i32 : i32, i32
  }
  func.func @transform_9(%arg0: i32) -> (i32, i32) {
    %c0_i32 = arith.constant 0 : i32
    %c0_i32_0 = arith.constant 0 : i32
    return %c0_i32, %arg0 : i32, i32
  }
}

</mosaic_0001>

<llo_original>
// kernel: tpu_custom_call.1
$region0: #{tpu_custom_call.1}
  #allocation0 [shape = 'u32[]', space=smem, size = 0x4, offset = 0x4, fixed_abs, tag = 'smem constant byte address 0x4 - core index']
  #allocation1 [shape = 'u32[144,128]{1,0:T(1,128)}', space=vmem, size = 0x12000, scoped, tag = 'internal scratch']
  %s0 = inlined_call_operand.vmem [shape: f32[256,32], index: 0, kind: input, shape index: {}]
  %s1 = inlined_call_operand.vmem [shape: f32[1,32], index: 1, kind: input, shape index: {}]
  %s2 = inlined_call_operand.vmem [shape: f32[32,128], index: 2, kind: input, shape index: {}]
  %s3 = inlined_call_operand.vmem [shape: f32[1,128], index: 3, kind: input, shape index: {}]
  %s4 = inlined_call_operand.vmem [shape: f32[128,128], index: 4, kind: input, shape index: {}]
  %s5 = inlined_call_operand.vmem [shape: f32[1,128], index: 5, kind: input, shape index: {}]
  %s6 = inlined_call_operand.vmem [shape: f32[128,64], index: 6, kind: input, shape index: {}]
  %s7 = inlined_call_operand.vmem [shape: f32[1,64], index: 7, kind: input, shape index: {}]
  %s8 = inlined_call_operand.vmem [shape: f32[256,32], index: 8, kind: output, shape index: {0}]
  %s9 = inlined_call_operand.hbm [shape: f32[1,256], index: 9, kind: output, shape index: {1}]
  %10 = xla_tuple %s8, %s9
  %s11 = sld [smem:[#allocation0]]
  $region73: #{tpu_custom_call.1} parent=0
    _
  %s13 = ssub.s32 1, %s11
  %s14 = scalar_select 0, %s13, %s11
  $region1: #{tpu_custom_call.1} parent=0
    #allocation2 [shape = 'u8[1024]{0}', space=vmem, size = 0x400, scoped, tag = 'output window, operand 1']
    #allocation3 [shape = 's32[2]{0}', space=sflag, size = 0x8, scoped, tag = 'scoped memory for tpu_custom_call.1']
    %15 = vsyncpa [#allocation3], 0
    %s16 = scalar_lea.sflag [#allocation3], 1
    %17 = vsyncpa %s16, 0
    loop: start=0, step=1, limit=4
    $region2: #{tpu_custom_call.1} parent=1 // loop_pre_header
      _
    $region3: #{tpu_custom_call.1} parent=1 // loop_header
      %s19 = sphi 0, %s23
      %p20 = scmp.ge.s32.totalorder %s19, 4
      %s29 = sphi 0, %s31
      %s32 = sphi 0, %s29
      %s33 = sphi 0, %s32
      %s49 = sphi 0, %s33
      %s53 = sphi 0, %s53
      %s55 = sphi 0, %s53
      %s56 = sphi 0, %s55
      %s70 = sphi 0, %s56
      %s74 = sphi 0, %s74
      %s76 = sphi 0, %s74
      %s77 = sphi 0, %s76
      %s91 = sphi 0, %s77
      %s95 = sphi 0, %s95
      %s97 = sphi 0, %s95
      %s98 = sphi 0, %s97
      %s112 = sphi 0, %s98
      %s116 = sphi 0, %s116
      %s118 = sphi 0, %s116
      %s119 = sphi 0, %s118
      %s133 = sphi 0, %s119
      %s137 = sphi 0, %s137
      %s139 = sphi 0, %s137
      %s140 = sphi 0, %s139
      %s154 = sphi 0, %s140
      %s158 = sphi 0, %s158
      %s160 = sphi 0, %s158
      %s161 = sphi 0, %s160
      %s175 = sphi 0, %s161
      %s179 = sphi 0, %s179
      %s181 = sphi 0, %s179
      %s182 = sphi 0, %s181
      %s196 = sphi 0, %s182
      %s202 = sphi 0, %s204
      %s205 = sphi 0, %s202
      %s206 = sphi 0, %s205
      %s222 = sphi 0, %s206
      %s228 = sphi 0, %s230
      %s231 = sphi 0, %s228
      %s232 = sphi 0, %s231
      %s248 = sphi 0, %s232
    $region4: #{tpu_custom_call.1} parent=1 // loop_header_branch
      %22 = sbr.rel (%p20) target = $region8
    $region5: #{tpu_custom_call.1} parent=1 // loop_body
      %s24 = ssub.s32 %s19, 1
      %s25 = ssub.s32 %s19, 2
      %s26 = sadd.s32 %s19, 1
      %s27 = ssub.s32 %s19, %s26
      %p28 = scmp.eq.s32.totalorder %s27, 0
      %s30 = sadd.s32 %s29, 1
      %s31 = scalar_select %p28, %s29, %s30
      %p34 = pneg %p28
      %p35 = scmp.eq.s32.totalorder %s19, 1
      %p36 = por %p34, %p35
      %p37 = scmp.ne.s32.totalorder %s29, %s32
      %p38 = scmp.eq.s32.totalorder %s19, 0
      %p39 = por %p37, %p38
      %p40 = scmp.ne.s32.totalorder %s29, %s32
      %p41 = scmp.eq.s32.totalorder %s24, 1
      %p42 = por %p40, %p41
      %p43 = scmp.ne.s32.totalorder %s32, %s33
      %p44 = scmp.eq.s32.totalorder %s24, 0
      %p45 = por %p43, %p44
      %p46 = scmp.ne.s32.totalorder %s32, %s33
      %p47 = scmp.eq.s32.totalorder %s25, 1
      %p48 = por %p46, %p47
      %p50 = scmp.ne.s32.totalorder %s33, %s49
      %p51 = scmp.eq.s32.totalorder %s25, 0
      %p52 = por %p50, %p51
      %s54 = sadd.s32 %s53, 1
      %p57 = scmp.eq.s32.totalorder %s19, 1
      %p58 = scmp.ne.s32.totalorder %s53, %s55
      %p59 = scmp.eq.s32.totalorder %s19, 0
      %p60 = por %p58, %p59
      %p61 = scmp.ne.s32.totalorder %s53, %s55
      %p62 = scmp.eq.s32.totalorder %s24, 1
      %p63 = por %p61, %p62
      %p64 = scmp.ne.s32.totalorder %s55, %s56
      %p65 = scmp.eq.s32.totalorder %s24, 0
      %p66 = por %p64, %p65
      %p67 = scmp.ne.s32.totalorder %s55, %s56
      %p68 = scmp.eq.s32.totalorder %s25, 1
      %p69 = por %p67, %p68
      %p71 = scmp.ne.s32.totalorder %s56, %s70
      %p72 = scmp.eq.s32.totalorder %s25, 0
      %p73 = por %p71, %p72
      %s75 = sadd.s32 %s74, 1
      %p78 = scmp.eq.s32.totalorder %s19, 1
      %p79 = scmp.ne.s32.totalorder %s74, %s76
      %p80 = scmp.eq.s32.totalorder %s19, 0
      %p81 = por %p79, %p80
      %p82 = scmp.ne.s32.totalorder %s74, %s76
      %p83 = scmp.eq.s32.totalorder %s24, 1
      %p84 = por %p82, %p83
      %p85 = scmp.ne.s32.totalorder %s76, %s77
      %p86 = scmp.eq.s32.totalorder %s24, 0
      %p87 = por %p85, %p86
      %p88 = scmp.ne.s32.totalorder %s76, %s77
      %p89 = scmp.eq.s32.totalorder %s25, 1
      %p90 = por %p88, %p89
      %p92 = scmp.ne.s32.totalorder %s77, %s91
      %p93 = scmp.eq.s32.totalorder %s25, 0
      %p94 = por %p92, %p93
      %s96 = sadd.s32 %s95, 1
      %p99 = scmp.eq.s32.totalorder %s19, 1
      %p100 = scmp.ne.s32.totalorder %s95, %s97
      %p101 = scmp.eq.s32.totalorder %s19, 0
      %p102 = por %p100, %p101
      %p103 = scmp.ne.s32.totalorder %s95, %s97
      %p104 = scmp.eq.s32.totalorder %s24, 1
      %p105 = por %p103, %p104
      %p106 = scmp.ne.s32.totalorder %s97, %s98
      %p107 = scmp.eq.s32.totalorder %s24, 0
      %p108 = por %p106, %p107
      %p109 = scmp.ne.s32.totalorder %s97, %s98
      %p110 = scmp.eq.s32.totalorder %s25, 1
      %p111 = por %p109, %p110
      %p113 = scmp.ne.s32.totalorder %s98, %s112
      %p114 = scmp.eq.s32.totalorder %s25, 0
      %p115 = por %p113, %p114
      %s117 = sadd.s32 %s116, 1
      %p120 = scmp.eq.s32.totalorder %s19, 1
      %p121 = scmp.ne.s32.totalorder %s116, %s118
      %p122 = scmp.eq.s32.totalorder %s19, 0
      %p123 = por %p121, %p122
      %p124 = scmp.ne.s32.totalorder %s116, %s118
      %p125 = scmp.eq.s32.totalorder %s24, 1
      %p126 = por %p124, %p125
      %p127 = scmp.ne.s32.totalorder %s118, %s119
      %p128 = scmp.eq.s32.totalorder %s24, 0
      %p129 = por %p127, %p128
      %p130 = scmp.ne.s32.totalorder %s118, %s119
      %p131 = scmp.eq.s32.totalorder %s25, 1
      %p132 = por %p130, %p131
      %p134 = scmp.ne.s32.totalorder %s119, %s133
      %p135 = scmp.eq.s32.totalorder %s25, 0
      %p136 = por %p134, %p135
      %s138 = sadd.s32 %s137, 1
      %p141 = scmp.eq.s32.totalorder %s19, 1
      %p142 = scmp.ne.s32.totalorder %s137, %s139
      %p143 = scmp.eq.s32.totalorder %s19, 0
      %p144 = por %p142, %p143
      %p145 = scmp.ne.s32.totalorder %s137, %s139
      %p146 = scmp.eq.s32.totalorder %s24, 1
      %p147 = por %p145, %p146
      %p148 = scmp.ne.s32.totalorder %s139, %s140
      %p149 = scmp.eq.s32.totalorder %s24, 0
      %p150 = por %p148, %p149
      %p151 = scmp.ne.s32.totalorder %s139, %s140
      %p152 = scmp.eq.s32.totalorder %s25, 1
      %p153 = por %p151, %p152
      %p155 = scmp.ne.s32.totalorder %s140, %s154
      %p156 = scmp.eq.s32.totalorder %s25, 0
      %p157 = por %p155, %p156
      %s159 = sadd.s32 %s158, 1
      %p162 = scmp.eq.s32.totalorder %s19, 1
      %p163 = scmp.ne.s32.totalorder %s158, %s160
      %p164 = scmp.eq.s32.totalorder %s19, 0
      %p165 = por %p163, %p164
      %p166 = scmp.ne.s32.totalorder %s158, %s160
      %p167 = scmp.eq.s32.totalorder %s24, 1
      %p168 = por %p166, %p167
      %p169 = scmp.ne.s32.totalorder %s160, %s161
      %p170 = scmp.eq.s32.totalorder %s24, 0
      %p171 = por %p169, %p170
      %p172 = scmp.ne.s32.totalorder %s160, %s161
      %p173 = scmp.eq.s32.totalorder %s25, 1
      %p174 = por %p172, %p173
      %p176 = scmp.ne.s32.totalorder %s161, %s175
      %p177 = scmp.eq.s32.totalorder %s25, 0
      %p178 = por %p176, %p177
      %s180 = sadd.s32 %s179, 1
      %p183 = scmp.eq.s32.totalorder %s19, 1
      %p184 = scmp.ne.s32.totalorder %s179, %s181
      %p185 = scmp.eq.s32.totalorder %s19, 0
      %p186 = por %p184, %p185
      %p187 = scmp.ne.s32.totalorder %s179, %s181
      %p188 = scmp.eq.s32.totalorder %s24, 1
      %p189 = por %p187, %p188
      %p190 = scmp.ne.s32.totalorder %s181, %s182
      %p191 = scmp.eq.s32.totalorder %s24, 0
      %p192 = por %p190, %p191
      %p193 = scmp.ne.s32.totalorder %s181, %s182
      %p194 = scmp.eq.s32.totalorder %s25, 1
      %p195 = por %p193, %p194
      %p197 = scmp.ne.s32.totalorder %s182, %s196
      %p198 = scmp.eq.s32.totalorder %s25, 0
      %p199 = por %p197, %p198
      %s200 = ssub.s32 %s19, %s26
      %p201 = scmp.eq.s32.totalorder %s200, 0
      %s203 = sadd.s32 %s202, 1
      %s204 = scalar_select %p201, %s202, %s203
      %p207 = pneg %p201
      %p208 = scmp.eq.s32.totalorder %s19, 1
      %p209 = por %p207, %p208
      %p210 = scmp.ne.s32.totalorder %s202, %s205
      %p211 = scmp.eq.s32.totalorder %s19, 0
      %p212 = por %p210, %p211
      %p213 = scmp.ne.s32.totalorder %s202, %s205
      %p214 = scmp.eq.s32.totalorder %s24, 1
      %p215 = por %p213, %p214
      %p216 = scmp.ne.s32.totalorder %s205, %s206
      %p217 = scmp.eq.s32.totalorder %s24, 0
      %p218 = por %p216, %p217
      %p219 = scmp.ne.s32.totalorder %s205, %s206
      %p220 = scmp.eq.s32.totalorder %s25, 1
      %p221 = por %p219, %p220
      %p223 = scmp.ne.s32.totalorder %s206, %s222
      %p224 = scmp.eq.s32.totalorder %s25, 0
      %p225 = por %p223, %p224
      %s226 = ssub.s32 %s19, %s26
      %p227 = scmp.eq.s32.totalorder %s226, 0
      %s229 = sadd.s32 %s228, 1
      %s230 = scalar_select %p227, %s228, %s229
      %p233 = pneg %p227
      %p234 = scmp.eq.s32.totalorder %s19, 1
      %p235 = por %p233, %p234
      %p236 = scmp.ne.s32.totalorder %s228, %s231
      %p237 = scmp.eq.s32.totalorder %s19, 0
      %p238 = por %p236, %p237
      %p239 = scmp.ne.s32.totalorder %s228, %s231
      %p240 = scmp.eq.s32.totalorder %s24, 1
      %p241 = por %p239, %p240
      %p242 = scmp.ne.s32.totalorder %s231, %s232
      %p243 = scmp.eq.s32.totalorder %s24, 0
      %p244 = por %p242, %p243
      %p245 = scmp.ne.s32.totalorder %s231, %s232
      %p246 = scmp.eq.s32.totalorder %s25, 1
      %p247 = por %p245, %p246
      %p249 = scmp.ne.s32.totalorder %s232, %s248
      %p250 = scmp.eq.s32.totalorder %s25, 0
      %p251 = por %p249, %p250
      %p252 = scmp.le.s32.totalorder 1, %s19
      %p253 = scmp.lt.s32.totalorder %s19, 3
      %p254 = pnand %p252, %p253
      %p255 = pneg %p254
      // Predicated region
      $region9: #{tpu_custom_call.1} parent=5 // pred_check
        _
      $region10: #{tpu_custom_call.1} parent=5 // pred_check_branch
        %257 = sbr.rel (%p254) target = $region12
      $region11: #{tpu_custom_call.1} parent=5 // pred_region
        %s258 = ssub.s32 %s19, 1
        // Predicated region
        $region13: #{tpu_custom_call.1} parent=11 // pred_check
          %p259 = pneg %p66
        $region14: #{tpu_custom_call.1} parent=11 // pred_check_branch
          %261 = sbr.rel (%p259) target = $region16
        $region15: #{tpu_custom_call.1} parent=11 // pred_region
          _
        $region16: #{tpu_custom_call.1} parent=11 // pred_fallthru
          _
        // Predicated region
        $region17: #{tpu_custom_call.1} parent=11 // pred_check
          %p262 = pneg %p87
        $region18: #{tpu_custom_call.1} parent=11 // pred_check_branch
          %264 = sbr.rel (%p262) target = $region20
        $region19: #{tpu_custom_call.1} parent=11 // pred_region
          _
        $region20: #{tpu_custom_call.1} parent=11 // pred_fallthru
          _
        // Predicated region
        $region21: #{tpu_custom_call.1} parent=11 // pred_check
          %p265 = pneg %p108
        $region22: #{tpu_custom_call.1} parent=11 // pred_check_branch
          %267 = sbr.rel (%p265) target = $region24
        $region23: #{tpu_custom_call.1} parent=11 // pred_region
          _
        $region24: #{tpu_custom_call.1} parent=11 // pred_fallthru
          _
        // Predicated region
        $region25: #{tpu_custom_call.1} parent=11 // pred_check
          %p268 = pneg %p129
        $region26: #{tpu_custom_call.1} parent=11 // pred_check_branch
          %270 = sbr.rel (%p268) target = $region28
        $region27: #{tpu_custom_call.1} parent=11 // pred_region
          _
        $region28: #{tpu_custom_call.1} parent=11 // pred_fallthru
          _
        // Predicated region
        $region29: #{tpu_custom_call.1} parent=11 // pred_check
          %p271 = pneg %p150
        $region30: #{tpu_custom_call.1} parent=11 // pred_check_branch
          %273 = sbr.rel (%p271) target = $region32
        $region31: #{tpu_custom_call.1} parent=11 // pred_region
          _
        $region32: #{tpu_custom_call.1} parent=11 // pred_fallthru
          _
        // Predicated region
        $region33: #{tpu_custom_call.1} parent=11 // pred_check
          %p274 = pneg %p171
        $region34: #{tpu_custom_call.1} parent=11 // pred_check_branch
          %276 = sbr.rel (%p274) target = $region36
        $region35: #{tpu_custom_call.1} parent=11 // pred_region
          _
        $region36: #{tpu_custom_call.1} parent=11 // pred_fallthru
          _
        // Predicated region
        $region37: #{tpu_custom_call.1} parent=11 // pred_check
          %p277 = pneg %p192
        $region38: #{tpu_custom_call.1} parent=11 // pred_check_branch
          %279 = sbr.rel (%p277) target = $region40
        $region39: #{tpu_custom_call.1} parent=11 // pred_region
          _
        $region40: #{tpu_custom_call.1} parent=11 // pred_fallthru
          _
      $region12: #{tpu_custom_call.1} parent=5 // pred_fallthru
        _
      %p280 = scmp.lt.s32.totalorder %s19, 2
      // Predicated region
      $region41: #{tpu_custom_call.1} parent=5 // pred_check
        %p281 = pneg %p280
      $region42: #{tpu_custom_call.1} parent=5 // pred_check_branch
        %283 = sbr.rel (%p281) target = $region44
      $region43: #{tpu_custom_call.1} parent=5 // pred_region
        // Predicated region
        $region45: #{tpu_custom_call.1} parent=43 // pred_check
          %p284 = pneg %p39
        $region46: #{tpu_custom_call.1} parent=43 // pred_check_branch
          %286 = sbr.rel (%p284) target = $region48
        $region47: #{tpu_custom_call.1} parent=43 // pred_region
          %s287 = smul.u32 16, %s19
          %p288 = scmp.lt.s32.totalorder %s287, 31
          %s289 = scalar_select %p288, %s287, 31
          %s290 = smul.addr %s289, 8
          %s291 = scalar_lea.vmem %s0, %s290
          %s292 = smul.u32 16, %s19
        $region48: #{tpu_custom_call.1} parent=43 // pred_fallthru
          _
      $region44: #{tpu_custom_call.1} parent=5 // pred_fallthru
        _
      %p293 = scmp.le.s32.totalorder 1, %s19
      %p294 = scmp.lt.s32.totalorder %s19, 3
      %p295 = pnand %p293, %p294
      %p296 = pneg %p295
      // Predicated region
      $region49: #{tpu_custom_call.1} parent=5 // pred_check
        _
      $region50: #{tpu_custom_call.1} parent=5 // pred_check_branch
        %298 = sbr.rel (%p295) target = $region52
      $region51: #{tpu_custom_call.1} parent=5 // pred_region
        %s299 = ssub.s32 %s19, 1
        %s300 = smul.u32 16, %s24
        %p301 = scmp.lt.s32.totalorder %s300, 31
        %s302 = scalar_select %p301, %s300, 31
        %s303 = smul.addr %s302, 8
        %s304 = scalar_lea.vmem %s0, %s303
        %p305 = pneg %p45
        %p306 = pneg %p42
        %p307 = pneg %p66
        %p308 = pneg %p63
        %p309 = pneg %p87
        %p310 = pneg %p84
        %p311 = pneg %p108
        %p312 = pneg %p105
        %p313 = pneg %p129
        %p314 = pneg %p126
        %p315 = pneg %p150
        %p316 = pneg %p147
        %p317 = pneg %p171
        %p318 = pneg %p168
        %p319 = pneg %p192
        %p320 = pneg %p189
        %p321 = pneg %p218
        %p322 = pneg %p215
        %s323 = smul.u32 16, %s24
        %p324 = scmp.lt.s32.totalorder %s323, 31
        %s325 = scalar_select %p324, %s323, 31
        %s326 = smul.addr %s325, 8
        %s327 = scalar_lea.vmem %s8, %s326
        %p328 = pneg %p244
        %p329 = pneg %p241
        %s330 = sand.u32 %s231, 1
        %s331 = scalar_lea.sflag [#allocation3], %s330
        %s332 = sand.u32 %s231, 1
        %s333 = scalar_lea.vmem [#allocation2], %s332
        %s334 = smul.u32 16, %s24
        %p335 = scmp.lt.s32.totalorder %s334, 31
        %s336 = scalar_select %p335, %s334, 31
        %s337 = smul.addr %s336, 8
        %s338 = scalar_lea.vmem %s0, %s337
        %s339 = smul.u32 16, %s24
        %s340 = smul.u32 16, %s24
        %p341 = scmp.lt.s32.totalorder %s340, 31
        %s342 = scalar_select %p341, %s340, 31
        %s343 = smul.addr %s342, 8
        %s344 = scalar_lea.vmem %s8, %s343
        %s345 = smul.u32 16, %s24
        %v346 = vld [vmem:[%s338] sm:$0xff]
        %v347 = vld [vmem:[%s338 + $0x8] sm:$0xff]
        %v348 = vld [vmem:[%s338 + $0x10] sm:$0xff]
        %v349 = vld [vmem:[%s338 + $0x18] sm:$0xff]
        %v350 = vld [vmem:[%s338 + $0x20] sm:$0xff]
        %v351 = vld [vmem:[%s338 + $0x28] sm:$0xff]
        %v352 = vld [vmem:[%s338 + $0x30] sm:$0xff]
        %v353 = vld [vmem:[%s338 + $0x38] sm:$0xff]
        %v354 = vld [vmem:[%s338 + $0x40] sm:$0xff]
        %v355 = vld [vmem:[%s338 + $0x48] sm:$0xff]
        %v356 = vld [vmem:[%s338 + $0x50] sm:$0xff]
        %v357 = vld [vmem:[%s338 + $0x58] sm:$0xff]
        %v358 = vld [vmem:[%s338 + $0x60] sm:$0xff]
        %v359 = vld [vmem:[%s338 + $0x68] sm:$0xff]
        %v360 = vld [vmem:[%s338 + $0x70] sm:$0xff]
        %v361 = vld [vmem:[%s338 + $0x78] sm:$0xff]
        %v362 = vld [vmem:[%s1] sm:$0x1]
        %v363 = vsub.f32 1.0, %v362
        %v365 = vlaneseq
        %v366 = vshrl.u32 %v365, 7
        %v367 = vsub.s32 0, %v366
        %v368 = vrot.slane %v362, %v367
        %v370 = vmul.f32 %v346, %v368
        %v371 = vmul.f32 %v347, %v368
        %v372 = vmul.f32 %v348, %v368
        %v373 = vmul.f32 %v349, %v368
        %v374 = vmul.f32 %v350, %v368
        %v375 = vmul.f32 %v351, %v368
        %v376 = vmul.f32 %v352, %v368
        %v377 = vmul.f32 %v353, %v368
        %v378 = vmul.f32 %v354, %v368
        %v379 = vmul.f32 %v355, %v368
        %v380 = vmul.f32 %v356, %v368
        %v381 = vmul.f32 %v357, %v368
        %v382 = vmul.f32 %v358, %v368
        %v383 = vmul.f32 %v359, %v368
        %v384 = vmul.f32 %v360, %v368
        %v385 = vmul.f32 %v361, %v368
        %v386 = vld [vmem:[%s2] sm:$0xff]
        %v387 = vld [vmem:[%s2 + $0x8] sm:$0xff]
        %v388 = vld [vmem:[%s2 + $0x10] sm:$0xff]
        %v389 = vld [vmem:[%s2 + $0x18] sm:$0xff]
        %v390 = vld [vmem:[%s3] sm:$0x1]
        %v392 = vlaneseq
        %v393 = vshrl.u32 %v392, 7
        %v394 = vsub.s32 0, %v393
        %v395 = vrot.slane %v390, %v394
        %vm397 = vcmask 261120
        %v399 = vsel %vm397, %v370, 0
        %v402 = vsel %vm397, %v371, 0
        %v405 = vsel %vm397, %v372, 0
        %v408 = vsel %vm397, %v373, 0
        %v411 = vsel %vm397, %v374, 0
        %v414 = vsel %vm397, %v375, 0
        %v417 = vsel %vm397, %v376, 0
        %v420 = vsel %vm397, %v377, 0
        %v423 = vsel %vm397, %v378, 0
        %v426 = vsel %vm397, %v379, 0
        %v429 = vsel %vm397, %v380, 0
        %v432 = vsel %vm397, %v381, 0
        %v435 = vsel %vm397, %v382, 0
        %v438 = vsel %vm397, %v383, 0
        %v441 = vsel %vm397, %v384, 0
        %v444 = vsel %vm397, %v385, 0
        %446 = vmatprep.subr.mxu0 0.0
        %447 = vmatpush1.msra.mxu0 0.0
        %448 = vmatprep.subr.mxu0 0.0
        %449 = vmatpush1.msra.mxu0 0.0
        %450 = vmatprep.subr.mxu0 0.0
        %451 = vmatpush1.msra.mxu0 0.0
        %452 = vmatprep.subr.mxu0 0.0
        %453 = vmatpush1.msra.mxu0 0.0
        %454 = vmatprep.subr.mxu0 0.0
        %455 = vmatpush1.msra.mxu0 0.0
        %456 = vmatprep.subr.mxu0 0.0
        %457 = vmatpush1.msra.mxu0 0.0
        %458 = vmatprep.subr.mxu0 0.0
        %459 = vmatpush1.msra.mxu0 0.0
        %460 = vmatprep.subr.mxu0 0.0
        %461 = vmatpush1.msra.mxu0 0.0
        %462 = vmatprep.subr.mxu0 0.0
        %463 = vmatpush1.msra.mxu0 0.0
        %464 = vmatprep.subr.mxu0 0.0
        %465 = vmatpush1.msra.mxu0 0.0
        %466 = vmatprep.subr.mxu0 0.0
        %467 = vmatpush1.msra.mxu0 0.0
        %468 = vmatprep.subr.mxu0 0.0
        %469 = vmatpush1.msra.mxu0 0.0
        %470 = vmatprep.subr.mxu0 0.0
        %471 = vmatpush1.msra.mxu0 %v389
        %472 = vmatprep.subr.mxu0 0.0
        %473 = vmatpush1.msra.mxu0 %v388
        %474 = vmatprep.subr.mxu0 0.0
        %475 = vmatpush1.msra.mxu0 %v387
        %476 = vmatprep.subr.mxu0 0.0
        %477 = vmatpush1.msra.mxu0 %v386
        %478 = vmatprep.subr.mxu0 0.0
        %479 = vmatpush2.msra.mxu0 0.0
        %480 = vmatprep.subr.mxu0 0.0
        %481 = vmatpush2.msra.mxu0 0.0
        %482 = vmatprep.subr.mxu0 0.0
        %483 = vmatpush2.msra.mxu0 0.0
        %484 = vmatprep.subr.mxu0 0.0
        %485 = vmatpush2.msra.mxu0 0.0
        %486 = vmatprep.subr.mxu0 0.0
        %487 = vmatpush2.msra.mxu0 0.0
        %488 = vmatprep.subr.mxu0 0.0
        %489 = vmatpush2.msra.mxu0 0.0
        %490 = vmatprep.subr.mxu0 0.0
        %491 = vmatpush2.msra.mxu0 0.0
        %492 = vmatprep.subr.mxu0 0.0
        %493 = vmatpush2.msra.mxu0 0.0
        %494 = vmatprep.subr.mxu0 0.0
        %495 = vmatpush2.msra.mxu0 0.0
        %496 = vmatprep.subr.mxu0 0.0
        %497 = vmatpush2.msra.mxu0 0.0
        %498 = vmatprep.subr.mxu0 0.0
        %499 = vmatpush2.msra.mxu0 0.0
        %500 = vmatprep.subr.mxu0 0.0
        %501 = vmatpush2.msra.mxu0 0.0
        %502 = vmatprep.subr.mxu0 0.0
        %503 = vmatpush2.msra.mxu0 0.0
        %504 = vmatprep.subr.mxu0 0.0
        %505 = vmatpush2.msra.mxu0 0.0
        %506 = vmatprep.subr.mxu0 0.0
        %507 = vmatpush2.msra.mxu0 0.0
        %508 = vmatprep.subr.mxu0 0.0
        %509 = vmatpush2.msra.mxu0 0.0
        %510 = vmatprep.mubr.f32.mxu0 0.0
        %511 = vmatmul.mubr.f32.gmra.mxu0 %v399
        %v512 = vpop.f32.mrf.mxu0
        %v513 = vadd.f32 %v395, %v512
        %v514 = vpop.f32.mrf.mxu0
        %515 = vmatprep.mubr.f32.mxu0 0.0
        %516 = vmatmul.mubr.f32.gmra.mxu0 %v402
        %v517 = vpop.f32.mrf.mxu0
        %v518 = vadd.f32 %v395, %v517
        %v519 = vpop.f32.mrf.mxu0
        %520 = vmatprep.mubr.f32.mxu0 0.0
        %521 = vmatmul.mubr.f32.gmra.mxu0 %v405
        %v522 = vpop.f32.mrf.mxu0
        %v523 = vadd.f32 %v395, %v522
        %v524 = vpop.f32.mrf.mxu0
        %525 = vmatprep.mubr.f32.mxu0 0.0
        %526 = vmatmul.mubr.f32.gmra.mxu0 %v408
        %v527 = vpop.f32.mrf.mxu0
        %v528 = vadd.f32 %v395, %v527
        %v529 = vpop.f32.mrf.mxu0
        %530 = vmatprep.mubr.f32.mxu0 0.0
        %531 = vmatmul.mubr.f32.gmra.mxu0 %v411
        %v532 = vpop.f32.mrf.mxu0
        %v533 = vadd.f32 %v395, %v532
        %v534 = vpop.f32.mrf.mxu0
        %535 = vmatprep.mubr.f32.mxu0 0.0
        %536 = vmatmul.mubr.f32.gmra.mxu0 %v414
        %v537 = vpop.f32.mrf.mxu0
        %v538 = vadd.f32 %v395, %v537
        %v539 = vpop.f32.mrf.mxu0
        %540 = vmatprep.mubr.f32.mxu0 0.0
        %541 = vmatmul.mubr.f32.gmra.mxu0 %v417
        %v542 = vpop.f32.mrf.mxu0
        %v543 = vadd.f32 %v395, %v542
        %v544 = vpop.f32.mrf.mxu0
        %545 = vmatprep.mubr.f32.mxu0 0.0
        %546 = vmatmul.mubr.f32.gmra.mxu0 %v420
        %v547 = vpop.f32.mrf.mxu0
        %v548 = vadd.f32 %v395, %v547
        %v549 = vpop.f32.mrf.mxu0
        %550 = vmatprep.mubr.f32.mxu0 0.0
        %551 = vmatmul.mubr.f32.gmra.mxu0 %v423
        %v552 = vpop.f32.mrf.mxu0
        %v553 = vadd.f32 %v395, %v552
        %v554 = vpop.f32.mrf.mxu0
        %555 = vmatprep.mubr.f32.mxu0 0.0
        %556 = vmatmul.mubr.f32.gmra.mxu0 %v426
        %v557 = vpop.f32.mrf.mxu0
        %v558 = vadd.f32 %v395, %v557
        %v559 = vpop.f32.mrf.mxu0
        %560 = vmatprep.mubr.f32.mxu0 0.0
        %561 = vmatmul.mubr.f32.gmra.mxu0 %v429
        %v562 = vpop.f32.mrf.mxu0
        %v563 = vadd.f32 %v395, %v562
        %v564 = vpop.f32.mrf.mxu0
        %565 = vmatprep.mubr.f32.mxu0 0.0
        %566 = vmatmul.mubr.f32.gmra.mxu0 %v432
        %v567 = vpop.f32.mrf.mxu0
        %v568 = vadd.f32 %v395, %v567
        %v569 = vpop.f32.mrf.mxu0
        %570 = vmatprep.mubr.f32.mxu0 0.0
        %571 = vmatmul.mubr.f32.gmra.mxu0 %v435
        %v572 = vpop.f32.mrf.mxu0
        %v573 = vadd.f32 %v395, %v572
        %v574 = vpop.f32.mrf.mxu0
        %575 = vmatprep.mubr.f32.mxu0 0.0
        %576 = vmatmul.mubr.f32.gmra.mxu0 %v438
        %v577 = vpop.f32.mrf.mxu0
        %v578 = vadd.f32 %v395, %v577
        %v579 = vpop.f32.mrf.mxu0
        %580 = vmatprep.mubr.f32.mxu0 0.0
        %581 = vmatmul.mubr.f32.gmra.mxu0 %v441
        %v582 = vpop.f32.mrf.mxu0
        %v583 = vadd.f32 %v395, %v582
        %v584 = vpop.f32.mrf.mxu0
        %585 = vmatprep.mubr.f32.mxu0 0.0
        %586 = vmatmul.mubr.f32.gmra.mxu0 %v444
        %v587 = vpop.f32.mrf.mxu0
        %v588 = vadd.f32 %v395, %v587
        %v589 = vpop.f32.mrf.mxu0
        %590 = vdwg.mxu0
        %v591 = vtanh.pop %v513
        %v592 = vtanh.pop %v518
        %v593 = vtanh.pop %v523
        %v594 = vtanh.pop %v528
        %v595 = vtanh.pop %v533
        %v596 = vtanh.pop %v538
        %v597 = vtanh.pop %v543
        %v598 = vtanh.pop %v548
        %v599 = vtanh.pop %v553
        %v600 = vtanh.pop %v558
        %v601 = vtanh.pop %v563
        %v602 = vtanh.pop %v568
        %v603 = vtanh.pop %v573
        %v604 = vtanh.pop %v578
        %v605 = vtanh.pop %v583
        %v606 = vtanh.pop %v588
        %v607 = vmax.f32 %v513, 0.0
        %v608 = vmax.f32 %v518, 0.0
        %v609 = vmax.f32 %v523, 0.0
        %v610 = vmax.f32 %v528, 0.0
        %v611 = vmax.f32 %v533, 0.0
        %v612 = vmax.f32 %v538, 0.0
        %v613 = vmax.f32 %v543, 0.0
        %v614 = vmax.f32 %v548, 0.0
        %v615 = vmax.f32 %v553, 0.0
        %v616 = vmax.f32 %v558, 0.0
        %v617 = vmax.f32 %v563, 0.0
        %v618 = vmax.f32 %v568, 0.0
        %v619 = vmax.f32 %v573, 0.0
        %v620 = vmax.f32 %v578, 0.0
        %v621 = vmax.f32 %v583, 0.0
        %v622 = vmax.f32 %v588, 0.0
        %vm623 = vcmask 523264
        %v624 = vsel %vm623, %v591, %v607
        %v625 = vsel %vm623, %v592, %v608
        %v626 = vsel %vm623, %v593, %v609
        %v627 = vsel %vm623, %v594, %v610
        %v628 = vsel %vm623, %v595, %v611
        %v629 = vsel %vm623, %v596, %v612
        %v630 = vsel %vm623, %v597, %v613
        %v631 = vsel %vm623, %v598, %v614
        %v632 = vsel %vm623, %v599, %v615
        %v633 = vsel %vm623, %v600, %v616
        %v634 = vsel %vm623, %v601, %v617
        %v635 = vsel %vm623, %v602, %v618
        %v636 = vsel %vm623, %v603, %v619
        %v637 = vsel %vm623, %v604, %v620
        %v638 = vsel %vm623, %v605, %v621
        %v639 = vsel %vm623, %v606, %v622
        %v640 = vld [vmem:[%s4] sm:$0xff]
        %v641 = vld [vmem:[%s4 + $0x8] sm:$0xff]
        %v642 = vld [vmem:[%s4 + $0x10] sm:$0xff]
        %v643 = vld [vmem:[%s4 + $0x18] sm:$0xff]
        %v644 = vld [vmem:[%s4 + $0x20] sm:$0xff]
        %v645 = vld [vmem:[%s4 + $0x28] sm:$0xff]
        %v646 = vld [vmem:[%s4 + $0x30] sm:$0xff]
        %v647 = vld [vmem:[%s4 + $0x38] sm:$0xff]
        %v648 = vld [vmem:[%s4 + $0x40] sm:$0xff]
        %v649 = vld [vmem:[%s4 + $0x48] sm:$0xff]
        %v650 = vld [vmem:[%s4 + $0x50] sm:$0xff]
        %v651 = vld [vmem:[%s4 + $0x58] sm:$0xff]
        %v652 = vld [vmem:[%s4 + $0x60] sm:$0xff]
        %v653 = vld [vmem:[%s4 + $0x68] sm:$0xff]
        %v654 = vld [vmem:[%s4 + $0x70] sm:$0xff]
        %v655 = vld [vmem:[%s4 + $0x78] sm:$0xff]
        %v656 = vld [vmem:[%s5] sm:$0x1]
        %v658 = vlaneseq
        %v659 = vshrl.u32 %v658, 7
        %v660 = vsub.s32 0, %v659
        %v661 = vrot.slane %v656, %v660
        %663 = vmatprep.subr.mxu0 0.0
        %664 = vmatpush1.msra.mxu0 %v655
        %665 = vmatprep.subr.mxu0 0.0
        %666 = vmatpush1.msra.mxu0 %v654
        %667 = vmatprep.subr.mxu0 0.0
        %668 = vmatpush1.msra.mxu0 %v653
        %669 = vmatprep.subr.mxu0 0.0
        %670 = vmatpush1.msra.mxu0 %v652
        %671 = vmatprep.subr.mxu0 0.0
        %672 = vmatpush1.msra.mxu0 %v651
        %673 = vmatprep.subr.mxu0 0.0
        %674 = vmatpush1.msra.mxu0 %v650
        %675 = vmatprep.subr.mxu0 0.0
        %676 = vmatpush1.msra.mxu0 %v649
        %677 = vmatprep.subr.mxu0 0.0
        %678 = vmatpush1.msra.mxu0 %v648
        %679 = vmatprep.subr.mxu0 0.0
        %680 = vmatpush1.msra.mxu0 %v647
        %681 = vmatprep.subr.mxu0 0.0
        %682 = vmatpush1.msra.mxu0 %v646
        %683 = vmatprep.subr.mxu0 0.0
        %684 = vmatpush1.msra.mxu0 %v645
        %685 = vmatprep.subr.mxu0 0.0
        %686 = vmatpush1.msra.mxu0 %v644
        %687 = vmatprep.subr.mxu0 0.0
        %688 = vmatpush1.msra.mxu0 %v643
        %689 = vmatprep.subr.mxu0 0.0
        %690 = vmatpush1.msra.mxu0 %v642
        %691 = vmatprep.subr.mxu0 0.0
        %692 = vmatpush1.msra.mxu0 %v641
        %693 = vmatprep.subr.mxu0 0.0
        %694 = vmatpush1.msra.mxu0 %v640
        %695 = vmatprep.subr.mxu0 0.0
        %696 = vmatpush2.msra.mxu0 0.0
        %697 = vmatprep.subr.mxu0 0.0
        %698 = vmatpush2.msra.mxu0 0.0
        %699 = vmatprep.subr.mxu0 0.0
        %700 = vmatpush2.msra.mxu0 0.0
        %701 = vmatprep.subr.mxu0 0.0
        %702 = vmatpush2.msra.mxu0 0.0
        %703 = vmatprep.subr.mxu0 0.0
        %704 = vmatpush2.msra.mxu0 0.0
        %705 = vmatprep.subr.mxu0 0.0
        %706 = vmatpush2.msra.mxu0 0.0
        %707 = vmatprep.subr.mxu0 0.0
        %708 = vmatpush2.msra.mxu0 0.0
        %709 = vmatprep.subr.mxu0 0.0
        %710 = vmatpush2.msra.mxu0 0.0
        %711 = vmatprep.subr.mxu0 0.0
        %712 = vmatpush2.msra.mxu0 0.0
        %713 = vmatprep.subr.mxu0 0.0
        %714 = vmatpush2.msra.mxu0 0.0
        %715 = vmatprep.subr.mxu0 0.0
        %716 = vmatpush2.msra.mxu0 0.0
        %717 = vmatprep.subr.mxu0 0.0
        %718 = vmatpush2.msra.mxu0 0.0
        %719 = vmatprep.subr.mxu0 0.0
        %720 = vmatpush2.msra.mxu0 0.0
        %721 = vmatprep.subr.mxu0 0.0
        %722 = vmatpush2.msra.mxu0 0.0
        %723 = vmatprep.subr.mxu0 0.0
        %724 = vmatpush2.msra.mxu0 0.0
        %725 = vmatprep.subr.mxu0 0.0
        %726 = vmatpush2.msra.mxu0 0.0
        %727 = vmatprep.mubr.f32.mxu0 0.0
        %728 = vmatmul.mubr.f32.gmra.mxu0 %v624
        %v729 = vpop.f32.mrf.mxu0
        %v730 = vadd.f32 %v661, %v729
        %v731 = vpop.f32.mrf.mxu0
        %732 = vmatprep.mubr.f32.mxu0 0.0
        %733 = vmatmul.mubr.f32.gmra.mxu0 %v625
        %v734 = vpop.f32.mrf.mxu0
        %v735 = vadd.f32 %v661, %v734
        %v736 = vpop.f32.mrf.mxu0
        %737 = vmatprep.mubr.f32.mxu0 0.0
        %738 = vmatmul.mubr.f32.gmra.mxu0 %v626
        %v739 = vpop.f32.mrf.mxu0
        %v740 = vadd.f32 %v661, %v739
        %v741 = vpop.f32.mrf.mxu0
        %742 = vmatprep.mubr.f32.mxu0 0.0
        %743 = vmatmul.mubr.f32.gmra.mxu0 %v627
        %v744 = vpop.f32.mrf.mxu0
        %v745 = vadd.f32 %v661, %v744
        %v746 = vpop.f32.mrf.mxu0
        %747 = vmatprep.mubr.f32.mxu0 0.0
        %748 = vmatmul.mubr.f32.gmra.mxu0 %v628
        %v749 = vpop.f32.mrf.mxu0
        %v750 = vadd.f32 %v661, %v749
        %v751 = vpop.f32.mrf.mxu0
        %752 = vmatprep.mubr.f32.mxu0 0.0
        %753 = vmatmul.mubr.f32.gmra.mxu0 %v629
        %v754 = vpop.f32.mrf.mxu0
        %v755 = vadd.f32 %v661, %v754
        %v756 = vpop.f32.mrf.mxu0
        %757 = vmatprep.mubr.f32.mxu0 0.0
        %758 = vmatmul.mubr.f32.gmra.mxu0 %v630
        %v759 = vpop.f32.mrf.mxu0
        %v760 = vadd.f32 %v661, %v759
        %v761 = vpop.f32.mrf.mxu0
        %762 = vmatprep.mubr.f32.mxu0 0.0
        %763 = vmatmul.mubr.f32.gmra.mxu0 %v631
        %v764 = vpop.f32.mrf.mxu0
        %v765 = vadd.f32 %v661, %v764
        %v766 = vpop.f32.mrf.mxu0
        %767 = vmatprep.mubr.f32.mxu0 0.0
        %768 = vmatmul.mubr.f32.gmra.mxu0 %v632
        %v769 = vpop.f32.mrf.mxu0
        %v770 = vadd.f32 %v661, %v769
        %v771 = vpop.f32.mrf.mxu0
        %772 = vmatprep.mubr.f32.mxu0 0.0
        %773 = vmatmul.mubr.f32.gmra.mxu0 %v633
        %v774 = vpop.f32.mrf.mxu0
        %v775 = vadd.f32 %v661, %v774
        %v776 = vpop.f32.mrf.mxu0
        %777 = vmatprep.mubr.f32.mxu0 0.0
        %778 = vmatmul.mubr.f32.gmra.mxu0 %v634
        %v779 = vpop.f32.mrf.mxu0
        %v780 = vadd.f32 %v661, %v779
        %v781 = vpop.f32.mrf.mxu0
        %782 = vmatprep.mubr.f32.mxu0 0.0
        %783 = vmatmul.mubr.f32.gmra.mxu0 %v635
        %v784 = vpop.f32.mrf.mxu0
        %v785 = vadd.f32 %v661, %v784
        %v786 = vpop.f32.mrf.mxu0
        %787 = vmatprep.mubr.f32.mxu0 0.0
        %788 = vmatmul.mubr.f32.gmra.mxu0 %v636
        %v789 = vpop.f32.mrf.mxu0
        %v790 = vadd.f32 %v661, %v789
        %v791 = vpop.f32.mrf.mxu0
        %792 = vmatprep.mubr.f32.mxu0 0.0
        %793 = vmatmul.mubr.f32.gmra.mxu0 %v637
        %v794 = vpop.f32.mrf.mxu0
        %v795 = vadd.f32 %v661, %v794
        %v796 = vpop.f32.mrf.mxu0
        %797 = vmatprep.mubr.f32.mxu0 0.0
        %798 = vmatmul.mubr.f32.gmra.mxu0 %v638
        %v799 = vpop.f32.mrf.mxu0
        %v800 = vadd.f32 %v661, %v799
        %v801 = vpop.f32.mrf.mxu0
        %802 = vmatprep.mubr.f32.mxu0 0.0
        %803 = vmatmul.mubr.f32.gmra.mxu0 %v639
        %v804 = vpop.f32.mrf.mxu0
        %v805 = vadd.f32 %v661, %v804
        %v806 = vpop.f32.mrf.mxu0
        %807 = vdwg.mxu0
        %v808 = vtanh.pop %v730
        %v809 = vtanh.pop %v735
        %v810 = vtanh.pop %v740
        %v811 = vtanh.pop %v745
        %v812 = vtanh.pop %v750
        %v813 = vtanh.pop %v755
        %v814 = vtanh.pop %v760
        %v815 = vtanh.pop %v765
        %v816 = vtanh.pop %v770
        %v817 = vtanh.pop %v775
        %v818 = vtanh.pop %v780
        %v819 = vtanh.pop %v785
        %v820 = vtanh.pop %v790
        %v821 = vtanh.pop %v795
        %v822 = vtanh.pop %v800
        %v823 = vtanh.pop %v805
        %v824 = vmax.f32 %v730, 0.0
        %v825 = vmax.f32 %v735, 0.0
        %v826 = vmax.f32 %v740, 0.0
        %v827 = vmax.f32 %v745, 0.0
        %v828 = vmax.f32 %v750, 0.0
        %v829 = vmax.f32 %v755, 0.0
        %v830 = vmax.f32 %v760, 0.0
        %v831 = vmax.f32 %v765, 0.0
        %v832 = vmax.f32 %v770, 0.0
        %v833 = vmax.f32 %v775, 0.0
        %v834 = vmax.f32 %v780, 0.0
        %v835 = vmax.f32 %v785, 0.0
        %v836 = vmax.f32 %v790, 0.0
        %v837 = vmax.f32 %v795, 0.0
        %v838 = vmax.f32 %v800, 0.0
        %v839 = vmax.f32 %v805, 0.0
        %v840 = vsel %vm623, %v808, %v824
        %v841 = vsel %vm623, %v809, %v825
        %v842 = vsel %vm623, %v810, %v826
        %v843 = vsel %vm623, %v811, %v827
        %v844 = vsel %vm623, %v812, %v828
        %v845 = vsel %vm623, %v813, %v829
        %v846 = vsel %vm623, %v814, %v830
        %v847 = vsel %vm623, %v815, %v831
        %v848 = vsel %vm623, %v816, %v832
        %v849 = vsel %vm623, %v817, %v833
        %v850 = vsel %vm623, %v818, %v834
        %v851 = vsel %vm623, %v819, %v835
        %v852 = vsel %vm623, %v820, %v836
        %v853 = vsel %vm623, %v821, %v837
        %v854 = vsel %vm623, %v822, %v838
        %v855 = vsel %vm623, %v823, %v839
        %v856 = vld [vmem:[%s6] sm:$0xff]
        %v857 = vld [vmem:[%s6 + $0x8] sm:$0xff]
        %v858 = vld [vmem:[%s6 + $0x10] sm:$0xff]
        %v859 = vld [vmem:[%s6 + $0x18] sm:$0xff]
        %v860 = vld [vmem:[%s6 + $0x20] sm:$0xff]
        %v861 = vld [vmem:[%s6 + $0x28] sm:$0xff]
        %v862 = vld [vmem:[%s6 + $0x30] sm:$0xff]
        %v863 = vld [vmem:[%s6 + $0x38] sm:$0xff]
        %v864 = vld [vmem:[%s6 + $0x40] sm:$0xff]
        %v865 = vld [vmem:[%s6 + $0x48] sm:$0xff]
        %v866 = vld [vmem:[%s6 + $0x50] sm:$0xff]
        %v867 = vld [vmem:[%s6 + $0x58] sm:$0xff]
        %v868 = vld [vmem:[%s6 + $0x60] sm:$0xff]
        %v869 = vld [vmem:[%s6 + $0x68] sm:$0xff]
        %v870 = vld [vmem:[%s6 + $0x70] sm:$0xff]
        %v871 = vld [vmem:[%s6 + $0x78] sm:$0xff]
        %v872 = vld [vmem:[%s7] sm:$0x1]
        %v874 = vlaneseq
        %v875 = vshrl.u32 %v874, 7
        %v876 = vsub.s32 0, %v875
        %v877 = vrot.slane %v872, %v876
        %879 = vmatprep.subr.mxu0 0.0
        %880 = vmatpush1.msra.mxu0 %v871
        %881 = vmatprep.subr.mxu0 0.0
        %882 = vmatpush1.msra.mxu0 %v870
        %883 = vmatprep.subr.mxu0 0.0
        %884 = vmatpush1.msra.mxu0 %v869
        %885 = vmatprep.subr.mxu0 0.0
        %886 = vmatpush1.msra.mxu0 %v868
        %887 = vmatprep.subr.mxu0 0.0
        %888 = vmatpush1.msra.mxu0 %v867
        %889 = vmatprep.subr.mxu0 0.0
        %890 = vmatpush1.msra.mxu0 %v866
        %891 = vmatprep.subr.mxu0 0.0
        %892 = vmatpush1.msra.mxu0 %v865
        %893 = vmatprep.subr.mxu0 0.0
        %894 = vmatpush1.msra.mxu0 %v864
        %895 = vmatprep.subr.mxu0 0.0
        %896 = vmatpush1.msra.mxu0 %v863
        %897 = vmatprep.subr.mxu0 0.0
        %898 = vmatpush1.msra.mxu0 %v862
        %899 = vmatprep.subr.mxu0 0.0
        %900 = vmatpush1.msra.mxu0 %v861
        %901 = vmatprep.subr.mxu0 0.0
        %902 = vmatpush1.msra.mxu0 %v860
        %903 = vmatprep.subr.mxu0 0.0
        %904 = vmatpush1.msra.mxu0 %v859
        %905 = vmatprep.subr.mxu0 0.0
        %906 = vmatpush1.msra.mxu0 %v858
        %907 = vmatprep.subr.mxu0 0.0
        %908 = vmatpush1.msra.mxu0 %v857
        %909 = vmatprep.subr.mxu0 0.0
        %910 = vmatpush1.msra.mxu0 %v856
        %911 = vmatprep.subr.mxu0 0.0
        %912 = vmatpush2.msra.mxu0 0.0
        %913 = vmatprep.subr.mxu0 0.0
        %914 = vmatpush2.msra.mxu0 0.0
        %915 = vmatprep.subr.mxu0 0.0
        %916 = vmatpush2.msra.mxu0 0.0
        %917 = vmatprep.subr.mxu0 0.0
        %918 = vmatpush2.msra.mxu0 0.0
        %919 = vmatprep.subr.mxu0 0.0
        %920 = vmatpush2.msra.mxu0 0.0
        %921 = vmatprep.subr.mxu0 0.0
        %922 = vmatpush2.msra.mxu0 0.0
        %923 = vmatprep.subr.mxu0 0.0
        %924 = vmatpush2.msra.mxu0 0.0
        %925 = vmatprep.subr.mxu0 0.0
        %926 = vmatpush2.msra.mxu0 0.0
        %927 = vmatprep.subr.mxu0 0.0
        %928 = vmatpush2.msra.mxu0 0.0
        %929 = vmatprep.subr.mxu0 0.0
        %930 = vmatpush2.msra.mxu0 0.0
        %931 = vmatprep.subr.mxu0 0.0
        %932 = vmatpush2.msra.mxu0 0.0
        %933 = vmatprep.subr.mxu0 0.0
        %934 = vmatpush2.msra.mxu0 0.0
        %935 = vmatprep.subr.mxu0 0.0
        %936 = vmatpush2.msra.mxu0 0.0
        %937 = vmatprep.subr.mxu0 0.0
        %938 = vmatpush2.msra.mxu0 0.0
        %939 = vmatprep.subr.mxu0 0.0
        %940 = vmatpush2.msra.mxu0 0.0
        %941 = vmatprep.subr.mxu0 0.0
        %942 = vmatpush2.msra.mxu0 0.0
        %943 = vmatprep.mubr.f32.mxu0 0.0
        %944 = vmatmul.mubr.f32.gmra.mxu0 %v840
        %v945 = vpop.f32.mrf.mxu0
        %v946 = vadd.f32 %v877, %v945
        %v947 = vpop.f32.mrf.mxu0
        %948 = vmatprep.mubr.f32.mxu0 0.0
        %949 = vmatmul.mubr.f32.gmra.mxu0 %v841
        %v950 = vpop.f32.mrf.mxu0
        %v951 = vadd.f32 %v877, %v950
        %v952 = vpop.f32.mrf.mxu0
        %953 = vmatprep.mubr.f32.mxu0 0.0
        %954 = vmatmul.mubr.f32.gmra.mxu0 %v842
        %v955 = vpop.f32.mrf.mxu0
        %v956 = vadd.f32 %v877, %v955
        %v957 = vpop.f32.mrf.mxu0
        %958 = vmatprep.mubr.f32.mxu0 0.0
        %959 = vmatmul.mubr.f32.gmra.mxu0 %v843
        %v960 = vpop.f32.mrf.mxu0
        %v961 = vadd.f32 %v877, %v960
        %v962 = vpop.f32.mrf.mxu0
        %963 = vmatprep.mubr.f32.mxu0 0.0
        %964 = vmatmul.mubr.f32.gmra.mxu0 %v844
        %v965 = vpop.f32.mrf.mxu0
        %v966 = vadd.f32 %v877, %v965
        %v967 = vpop.f32.mrf.mxu0
        %968 = vmatprep.mubr.f32.mxu0 0.0
        %969 = vmatmul.mubr.f32.gmra.mxu0 %v845
        %v970 = vpop.f32.mrf.mxu0
        %v971 = vadd.f32 %v877, %v970
        %v972 = vpop.f32.mrf.mxu0
        %973 = vmatprep.mubr.f32.mxu0 0.0
        %974 = vmatmul.mubr.f32.gmra.mxu0 %v846
        %v975 = vpop.f32.mrf.mxu0
        %v976 = vadd.f32 %v877, %v975
        %v977 = vpop.f32.mrf.mxu0
        %978 = vmatprep.mubr.f32.mxu0 0.0
        %979 = vmatmul.mubr.f32.gmra.mxu0 %v847
        %v980 = vpop.f32.mrf.mxu0
        %v981 = vadd.f32 %v877, %v980
        %v982 = vpop.f32.mrf.mxu0
        %983 = vmatprep.mubr.f32.mxu0 0.0
        %984 = vmatmul.mubr.f32.gmra.mxu0 %v848
        %v985 = vpop.f32.mrf.mxu0
        %v986 = vadd.f32 %v877, %v985
        %v987 = vpop.f32.mrf.mxu0
        %988 = vmatprep.mubr.f32.mxu0 0.0
        %989 = vmatmul.mubr.f32.gmra.mxu0 %v849
        %v990 = vpop.f32.mrf.mxu0
        %v991 = vadd.f32 %v877, %v990
        %v992 = vpop.f32.mrf.mxu0
        %993 = vmatprep.mubr.f32.mxu0 0.0
        %994 = vmatmul.mubr.f32.gmra.mxu0 %v850
        %v995 = vpop.f32.mrf.mxu0
        %v996 = vadd.f32 %v877, %v995
        %v997 = vpop.f32.mrf.mxu0
        %998 = vmatprep.mubr.f32.mxu0 0.0
        %999 = vmatmul.mubr.f32.gmra.mxu0 %v851
        %v1000 = vpop.f32.mrf.mxu0
        %v1001 = vadd.f32 %v877, %v1000
        %v1002 = vpop.f32.mrf.mxu0
        %1003 = vmatprep.mubr.f32.mxu0 0.0
        %1004 = vmatmul.mubr.f32.gmra.mxu0 %v852
        %v1005 = vpop.f32.mrf.mxu0
        %v1006 = vadd.f32 %v877, %v1005
        %v1007 = vpop.f32.mrf.mxu0
        %1008 = vmatprep.mubr.f32.mxu0 0.0
        %1009 = vmatmul.mubr.f32.gmra.mxu0 %v853
        %v1010 = vpop.f32.mrf.mxu0
        %v1011 = vadd.f32 %v877, %v1010
        %v1012 = vpop.f32.mrf.mxu0
        %1013 = vmatprep.mubr.f32.mxu0 0.0
        %1014 = vmatmul.mubr.f32.gmra.mxu0 %v854
        %v1015 = vpop.f32.mrf.mxu0
        %v1016 = vadd.f32 %v877, %v1015
        %v1017 = vpop.f32.mrf.mxu0
        %1018 = vmatprep.mubr.f32.mxu0 0.0
        %1019 = vmatmul.mubr.f32.gmra.mxu0 %v855
        %v1020 = vpop.f32.mrf.mxu0
        %v1021 = vadd.f32 %v877, %v1020
        %v1022 = vpop.f32.mrf.mxu0
        %1023 = vdwg.mxu0
        %v1025 = vlaneseq
        %v1026 = vshrl.u32 %v1025, 7
        %v1027 = vsub.s32 0, %v1026
        %v1028 = vrot.slane %v363, %v1027
        %v1030 = vmul.f32 %v946, %v1028
        %v1031 = vmul.f32 %v951, %v1028
        %v1032 = vmul.f32 %v956, %v1028
        %v1033 = vmul.f32 %v961, %v1028
        %v1034 = vmul.f32 %v966, %v1028
        %v1035 = vmul.f32 %v971, %v1028
        %v1036 = vmul.f32 %v976, %v1028
        %v1037 = vmul.f32 %v981, %v1028
        %v1038 = vmul.f32 %v986, %v1028
        %v1039 = vmul.f32 %v991, %v1028
        %v1040 = vmul.f32 %v996, %v1028
        %v1041 = vmul.f32 %v1001, %v1028
        %v1042 = vmul.f32 %v1006, %v1028
        %v1043 = vmul.f32 %v1011, %v1028
        %v1044 = vmul.f32 %v1016, %v1028
        %v1045 = vmul.f32 %v1021, %v1028
        %1046 = vrot.lane.b32.xlu0 %v1028, 32
        %v1047 = vpop.permute.xlu0 %1046
        %v1049 = vmul.f32 %v946, %v1047
        %v1050 = vmul.f32 %v951, %v1047
        %v1051 = vmul.f32 %v956, %v1047
        %v1052 = vmul.f32 %v961, %v1047
        %v1053 = vmul.f32 %v966, %v1047
        %v1054 = vmul.f32 %v971, %v1047
        %v1055 = vmul.f32 %v976, %v1047
        %v1056 = vmul.f32 %v981, %v1047
        %v1057 = vmul.f32 %v986, %v1047
        %v1058 = vmul.f32 %v991, %v1047
        %v1059 = vmul.f32 %v996, %v1047
        %v1060 = vmul.f32 %v1001, %v1047
        %v1061 = vmul.f32 %v1006, %v1047
        %v1062 = vmul.f32 %v1011, %v1047
        %v1063 = vmul.f32 %v1016, %v1047
        %v1064 = vmul.f32 %v1021, %v1047
        %v1065 = vmul.f32 %v1030, 1.442695
        %v1066 = vpow.pop %v1065
        %v1067 = vmul.f32 %v1031, 1.442695
        %v1068 = vpow.pop %v1067
        %v1069 = vmul.f32 %v1032, 1.442695
        %v1070 = vpow.pop %v1069
        %v1071 = vmul.f32 %v1033, 1.442695
        %v1072 = vpow.pop %v1071
        %v1073 = vmul.f32 %v1034, 1.442695
        %v1074 = vpow.pop %v1073
        %v1075 = vmul.f32 %v1035, 1.442695
        %v1076 = vpow.pop %v1075
        %v1077 = vmul.f32 %v1036, 1.442695
        %v1078 = vpow.pop %v1077
        %v1079 = vmul.f32 %v1037, 1.442695
        %v1080 = vpow.pop %v1079
        %v1081 = vmul.f32 %v1038, 1.442695
        %v1082 = vpow.pop %v1081
        %v1083 = vmul.f32 %v1039, 1.442695
        %v1084 = vpow.pop %v1083
        %v1085 = vmul.f32 %v1040, 1.442695
        %v1086 = vpow.pop %v1085
        %v1087 = vmul.f32 %v1041, 1.442695
        %v1088 = vpow.pop %v1087
        %v1089 = vmul.f32 %v1042, 1.442695
        %v1090 = vpow.pop %v1089
        %v1091 = vmul.f32 %v1043, 1.442695
        %v1092 = vpow.pop %v1091
        %v1093 = vmul.f32 %v1044, 1.442695
        %v1094 = vpow.pop %v1093
        %v1095 = vmul.f32 %v1045, 1.442695
        %v1096 = vpow.pop %v1095
        %v1097 = vmul.f32 %v346, %v1066
        %v1098 = vmul.f32 %v347, %v1068
        %v1099 = vmul.f32 %v348, %v1070
        %v1100 = vmul.f32 %v349, %v1072
        %v1101 = vmul.f32 %v350, %v1074
        %v1102 = vmul.f32 %v351, %v1076
        %v1103 = vmul.f32 %v352, %v1078
        %v1104 = vmul.f32 %v353, %v1080
        %v1105 = vmul.f32 %v354, %v1082
        %v1106 = vmul.f32 %v355, %v1084
        %v1107 = vmul.f32 %v356, %v1086
        %v1108 = vmul.f32 %v357, %v1088
        %v1109 = vmul.f32 %v358, %v1090
        %v1110 = vmul.f32 %v359, %v1092
        %v1111 = vmul.f32 %v360, %v1094
        %v1112 = vmul.f32 %v361, %v1096
        %1129 = vrot.lane.b32.xlu0 %v1049, 96
        %v1130 = vpop.permute.xlu0 %1129
        %1131 = vrot.lane.b32.xlu0 %v1050, 96
        %v1132 = vpop.permute.xlu0 %1131
        %1133 = vrot.lane.b32.xlu0 %v1051, 96
        %v1134 = vpop.permute.xlu0 %1133
        %1135 = vrot.lane.b32.xlu0 %v1052, 96
        %v1136 = vpop.permute.xlu0 %1135
        %1137 = vrot.lane.b32.xlu0 %v1053, 96
        %v1138 = vpop.permute.xlu0 %1137
        %1139 = vrot.lane.b32.xlu0 %v1054, 96
        %v1140 = vpop.permute.xlu0 %1139
        %1141 = vrot.lane.b32.xlu0 %v1055, 96
        %v1142 = vpop.permute.xlu0 %1141
        %1143 = vrot.lane.b32.xlu0 %v1056, 96
        %v1144 = vpop.permute.xlu0 %1143
        %1145 = vrot.lane.b32.xlu0 %v1057, 96
        %v1146 = vpop.permute.xlu0 %1145
        %1147 = vrot.lane.b32.xlu0 %v1058, 96
        %v1148 = vpop.permute.xlu0 %1147
        %1149 = vrot.lane.b32.xlu0 %v1059, 96
        %v1150 = vpop.permute.xlu0 %1149
        %1151 = vrot.lane.b32.xlu0 %v1060, 96
        %v1152 = vpop.permute.xlu0 %1151
        %1153 = vrot.lane.b32.xlu0 %v1061, 96
        %v1154 = vpop.permute.xlu0 %1153
        %1155 = vrot.lane.b32.xlu0 %v1062, 96
        %v1156 = vpop.permute.xlu0 %1155
        %1157 = vrot.lane.b32.xlu0 %v1063, 96
        %v1158 = vpop.permute.xlu0 %1157
        %1159 = vrot.lane.b32.xlu0 %v1064, 96
        %v1160 = vpop.permute.xlu0 %1159
        %v1177 = vadd.f32 %v1097, %v1130
        %v1178 = vadd.f32 %v1098, %v1132
        %v1179 = vadd.f32 %v1099, %v1134
        %v1180 = vadd.f32 %v1100, %v1136
        %v1181 = vadd.f32 %v1101, %v1138
        %v1182 = vadd.f32 %v1102, %v1140
        %v1183 = vadd.f32 %v1103, %v1142
        %v1184 = vadd.f32 %v1104, %v1144
        %v1185 = vadd.f32 %v1105, %v1146
        %v1186 = vadd.f32 %v1106, %v1148
        %v1187 = vadd.f32 %v1107, %v1150
        %v1188 = vadd.f32 %v1108, %v1152
        %v1189 = vadd.f32 %v1109, %v1154
        %v1190 = vadd.f32 %v1110, %v1156
        %v1191 = vadd.f32 %v1111, %v1158
        %v1192 = vadd.f32 %v1112, %v1160
        %1193 = vst.msk [vmem:[%s344] sm:$0xff] %vm397, %v1177
        %1194 = vst.msk [vmem:[%s344 + $0x8] sm:$0xff] %vm397, %v1178
        %1195 = vst.msk [vmem:[%s344 + $0x10] sm:$0xff] %vm397, %v1179
        %1196 = vst.msk [vmem:[%s344 + $0x18] sm:$0xff] %vm397, %v1180
        %1197 = vst.msk [vmem:[%s344 + $0x20] sm:$0xff] %vm397, %v1181
        %1198 = vst.msk [vmem:[%s344 + $0x28] sm:$0xff] %vm397, %v1182
        %1199 = vst.msk [vmem:[%s344 + $0x30] sm:$0xff] %vm397, %v1183
        %1200 = vst.msk [vmem:[%s344 + $0x38] sm:$0xff] %vm397, %v1184
        %1201 = vst.msk [vmem:[%s344 + $0x40] sm:$0xff] %vm397, %v1185
        %1202 = vst.msk [vmem:[%s344 + $0x48] sm:$0xff] %vm397, %v1186
        %1203 = vst.msk [vmem:[%s344 + $0x50] sm:$0xff] %vm397, %v1187
        %1204 = vst.msk [vmem:[%s344 + $0x58] sm:$0xff] %vm397, %v1188
        %1205 = vst.msk [vmem:[%s344 + $0x60] sm:$0xff] %vm397, %v1189
        %1206 = vst.msk [vmem:[%s344 + $0x68] sm:$0xff] %vm397, %v1190
        %1207 = vst.msk [vmem:[%s344 + $0x70] sm:$0xff] %vm397, %v1191
        %1208 = vst.msk [vmem:[%s344 + $0x78] sm:$0xff] %vm397, %v1192
        %v1209 = vsel %vm397, %v1030, 0.0
        %1210 = vadd.xlane.f32.xlu0 %v1209
        %v1211 = vpop.xlane.xlu0 %1210
        %v1212 = vsel %vm397, %v1031, 0.0
        %1213 = vadd.xlane.f32.xlu0 %v1212
        %v1214 = vpop.xlane.xlu0 %1213
        %v1215 = vsel %vm397, %v1032, 0.0
        %1216 = vadd.xlane.f32.xlu0 %v1215
        %v1217 = vpop.xlane.xlu0 %1216
        %v1218 = vsel %vm397, %v1033, 0.0
        %1219 = vadd.xlane.f32.xlu0 %v1218
        %v1220 = vpop.xlane.xlu0 %1219
        %v1221 = vsel %vm397, %v1034, 0.0
        %1222 = vadd.xlane.f32.xlu0 %v1221
        %v1223 = vpop.xlane.xlu0 %1222
        %v1224 = vsel %vm397, %v1035, 0.0
        %1225 = vadd.xlane.f32.xlu0 %v1224
        %v1226 = vpop.xlane.xlu0 %1225
        %v1227 = vsel %vm397, %v1036, 0.0
        %1228 = vadd.xlane.f32.xlu0 %v1227
        %v1229 = vpop.xlane.xlu0 %1228
        %v1230 = vsel %vm397, %v1037, 0.0
        %1231 = vadd.xlane.f32.xlu0 %v1230
        %v1232 = vpop.xlane.xlu0 %1231
        %v1233 = vsel %vm397, %v1038, 0.0
        %1234 = vadd.xlane.f32.xlu0 %v1233
        %v1235 = vpop.xlane.xlu0 %1234
        %v1236 = vsel %vm397, %v1039, 0.0
        %1237 = vadd.xlane.f32.xlu0 %v1236
        %v1238 = vpop.xlane.xlu0 %1237
        %v1239 = vsel %vm397, %v1040, 0.0
        %1240 = vadd.xlane.f32.xlu0 %v1239
        %v1241 = vpop.xlane.xlu0 %1240
        %v1242 = vsel %vm397, %v1041, 0.0
        %1243 = vadd.xlane.f32.xlu0 %v1242
        %v1244 = vpop.xlane.xlu0 %1243
        %v1245 = vsel %vm397, %v1042, 0.0
        %1246 = vadd.xlane.f32.xlu0 %v1245
        %v1247 = vpop.xlane.xlu0 %1246
        %v1248 = vsel %vm397, %v1043, 0.0
        %1249 = vadd.xlane.f32.xlu0 %v1248
        %v1250 = vpop.xlane.xlu0 %1249
        %v1251 = vsel %vm397, %v1044, 0.0
        %1252 = vadd.xlane.f32.xlu0 %v1251
        %v1253 = vpop.xlane.xlu0 %1252
        %v1254 = vsel %vm397, %v1045, 0.0
        %1255 = vadd.xlane.f32.xlu0 %v1254
        %v1256 = vpop.xlane.xlu0 %1255
        %v1273 = vlaneseq
        %v1274 = vand.u32 %v1273, 127
        %v1275 = vlaneseq
        %v1276 = vshrl.u32 %v1275, 7
        %v1277 = vsub.s32 %v1274, %v1276
        %v1278 = vrot.slane %v1211, %v1277
        %v1279 = vadd.s32 %v1274, 4294967288
        %v1280 = vlaneseq
        %v1281 = vshrl.u32 %v1280, 7
        %v1282 = vsub.s32 %v1279, %v1281
        %v1283 = vrot.slane %v1214, %v1282
        %vm1284 = vcmask 130112
        %v1285 = vsel %vm1284, %v1283, %v1278
        %v1286 = vadd.s32 %v1274, 4294967280
        %v1287 = vlaneseq
        %v1288 = vshrl.u32 %v1287, 7
        %v1289 = vsub.s32 %v1286, %v1288
        %v1290 = vrot.slane %v1217, %v1289
        %vm1291 = vcmask 195712
        %v1292 = vsel %vm1291, %v1290, %v1285
        %v1293 = vadd.s32 %v1274, 4294967272
        %v1294 = vlaneseq
        %v1295 = vshrl.u32 %v1294, 7
        %v1296 = vsub.s32 %v1293, %v1295
        %v1297 = vrot.slane %v1220, %v1296
        %vm1298 = vcmask 261312
        %v1299 = vsel %vm1298, %v1297, %v1292
        %v1300 = vadd.s32 %v1274, 4294967264
        %v1301 = vlaneseq
        %v1302 = vshrl.u32 %v1301, 7
        %v1303 = vsub.s32 %v1300, %v1302
        %v1304 = vrot.slane %v1223, %v1303
        %vm1305 = vcmask 326912
        %v1306 = vsel %vm1305, %v1304, %v1299
        %v1307 = vadd.s32 %v1274, 4294967256
        %v1308 = vlaneseq
        %v1309 = vshrl.u32 %v1308, 7
        %v1310 = vsub.s32 %v1307, %v1309
        %v1311 = vrot.slane %v1226, %v1310
        %vm1312 = vcmask 392512
        %v1313 = vsel %vm1312, %v1311, %v1306
        %v1314 = vadd.s32 %v1274, 4294967248
        %v1315 = vlaneseq
        %v1316 = vshrl.u32 %v1315, 7
        %v1317 = vsub.s32 %v1314, %v1316
        %v1318 = vrot.slane %v1229, %v1317
        %vm1319 = vcmask 458112
        %v1320 = vsel %vm1319, %v1318, %v1313
        %v1321 = vadd.s32 %v1274, 4294967240
        %v1322 = vlaneseq
        %v1323 = vshrl.u32 %v1322, 7
        %v1324 = vsub.s32 %v1321, %v1323
        %v1325 = vrot.slane %v1232, %v1324
        %vm1326 = vcmask 523712
        %v1327 = vsel %vm1326, %v1325, %v1320
        %v1328 = vadd.s32 %v1274, 4294967232
        %v1329 = vlaneseq
        %v1330 = vshrl.u32 %v1329, 7
        %v1331 = vsub.s32 %v1328, %v1330
        %v1332 = vrot.slane %v1235, %v1331
        %vm1333 = vcmask 589312
        %v1334 = vsel %vm1333, %v1332, %v1327
        %v1335 = vadd.s32 %v1274, 4294967224
        %v1336 = vlaneseq
        %v1337 = vshrl.u32 %v1336, 7
        %v1338 = vsub.s32 %v1335, %v1337
        %v1339 = vrot.slane %v1238, %v1338
        %vm1340 = vcmask 654912
        %v1341 = vsel %vm1340, %v1339, %v1334
        %v1342 = vadd.s32 %v1274, 4294967216
        %v1343 = vlaneseq
        %v1344 = vshrl.u32 %v1343, 7
        %v1345 = vsub.s32 %v1342, %v1344
        %v1346 = vrot.slane %v1241, %v1345
        %vm1347 = vcmask 720512
        %v1348 = vsel %vm1347, %v1346, %v1341
        %v1349 = vadd.s32 %v1274, 4294967208
        %v1350 = vlaneseq
        %v1351 = vshrl.u32 %v1350, 7
        %v1352 = vsub.s32 %v1349, %v1351
        %v1353 = vrot.slane %v1244, %v1352
        %vm1354 = vcmask 786112
        %v1355 = vsel %vm1354, %v1353, %v1348
        %v1356 = vadd.s32 %v1274, 4294967200
        %v1357 = vlaneseq
        %v1358 = vshrl.u32 %v1357, 7
        %v1359 = vsub.s32 %v1356, %v1358
        %v1360 = vrot.slane %v1247, %v1359
        %vm1361 = vcmask 851712
        %v1362 = vsel %vm1361, %v1360, %v1355
        %v1363 = vadd.s32 %v1274, 4294967192
        %v1364 = vlaneseq
        %v1365 = vshrl.u32 %v1364, 7
        %v1366 = vsub.s32 %v1363, %v1365
        %v1367 = vrot.slane %v1250, %v1366
        %vm1368 = vcmask 917312
        %v1369 = vsel %vm1368, %v1367, %v1362
        %v1370 = vadd.s32 %v1274, 4294967184
        %v1371 = vlaneseq
        %v1372 = vshrl.u32 %v1371, 7
        %v1373 = vsub.s32 %v1370, %v1372
        %v1374 = vrot.slane %v1253, %v1373
        %vm1375 = vcmask 982912
        %v1376 = vsel %vm1375, %v1374, %v1369
        %v1377 = vadd.s32 %v1274, 4294967176
        %v1378 = vlaneseq
        %v1379 = vshrl.u32 %v1378, 7
        %v1380 = vsub.s32 %v1377, %v1379
        %v1381 = vrot.slane %v1256, %v1380
        %vm1382 = vcmask 1048512
        %v1383 = vsel %vm1382, %v1381, %v1376
        %1385 = vst [vmem:[%s333] sm:$0x1] %v1383
        %s1386 = smul.u32 16, %s24
        %p1387 = scmp.lt.s32.totalorder %s1386, 31
        %s1388 = scalar_select %p1387, %s1386, 31
        %s1389 = smul.addr %s1388, 8
        %s1390 = scalar_lea.vmem %s8, %s1389
        %s1391 = sand.u32 %s231, 1
        %s1392 = scalar_lea.sflag [#allocation3], %s1391
        %s1393 = sand.u32 %s231, 1
        %s1394 = scalar_lea.vmem [#allocation2], %s1393
        // Predicated region
        $region53: #{tpu_custom_call.1} parent=51 // pred_check
          %p1395 = pneg %p215
        $region54: #{tpu_custom_call.1} parent=51 // pred_check_branch
          %1397 = sbr.rel (%p1395) target = $region56
        $region55: #{tpu_custom_call.1} parent=51 // pred_region
          %s1398 = smul.u32 16, %s24
        $region56: #{tpu_custom_call.1} parent=51 // pred_fallthru
          _
        // Predicated region
        $region57: #{tpu_custom_call.1} parent=51 // pred_check
          %p1399 = pneg %p241
        $region58: #{tpu_custom_call.1} parent=51 // pred_check_branch
          %1401 = sbr.rel (%p1399) target = $region60
        $region59: #{tpu_custom_call.1} parent=51 // pred_region
          %s1403 = ssub.s32 16, 16
          %1404 = vsyncadd %s1392, %s1403
          %s1405 = smul.addr %s24, 16
          %s1406 = scalar_lea.hbm %s9, %s1405
          %s1408 = sshll.u32 %s1394, 4
          %s1409 = int_to_ptr.vmem [resolvable:$true] %s1408
          %1411 = dma.vmem_to_hbm [thread:$0]  %s1409, 16, %s1406, %s1392
        $region60: #{tpu_custom_call.1} parent=51 // pred_fallthru
          _
      $region52: #{tpu_custom_call.1} parent=5 // pred_fallthru
        _
      %p1412 = scmp.le.s32.totalorder 2, %s19
      // Predicated region
      $region61: #{tpu_custom_call.1} parent=5 // pred_check
        %p1413 = pneg %p1412
      $region62: #{tpu_custom_call.1} parent=5 // pred_check_branch
        %1415 = sbr.rel (%p1413) target = $region64
      $region63: #{tpu_custom_call.1} parent=5 // pred_region
        %s1416 = ssub.s32 %s19, 2
        // Predicated region
        $region65: #{tpu_custom_call.1} parent=63 // pred_check
          %p1417 = pneg %p221
        $region66: #{tpu_custom_call.1} parent=63 // pred_check_branch
          %1419 = sbr.rel (%p1417) target = $region68
        $region67: #{tpu_custom_call.1} parent=63 // pred_region
          %s1420 = smul.u32 16, %s25
          %p1421 = scmp.lt.s32.totalorder %s1420, 31
          %s1422 = scalar_select %p1421, %s1420, 31
          %s1423 = smul.addr %s1422, 8
          %s1424 = scalar_lea.vmem %s8, %s1423
        $region68: #{tpu_custom_call.1} parent=63 // pred_fallthru
          _
        // Predicated region
        $region69: #{tpu_custom_call.1} parent=63 // pred_check
          %p1425 = pneg %p247
        $region70: #{tpu_custom_call.1} parent=63 // pred_check_branch
          %1427 = sbr.rel (%p1425) target = $region72
        $region71: #{tpu_custom_call.1} parent=63 // pred_region
          %s1428 = sand.u32 %s232, 1
          %s1429 = scalar_lea.sflag [#allocation3], %s1428
          %s1430 = sand.u32 %s232, 1
          %s1431 = scalar_lea.vmem [#allocation2], %s1430
          %1432 = dma.done %s1429, 16
        $region72: #{tpu_custom_call.1} parent=63 // pred_fallthru
          _
      $region64: #{tpu_custom_call.1} parent=5 // pred_fallthru
        _
    $region6: #{tpu_custom_call.1} parent=1 // loop_footer
      %s23 = sadd.s32 1, %s19
    $region7: #{tpu_custom_call.1} parent=1 // loop_footer_branch
      %18 = sbr.rel target = $region3
    $region8: #{tpu_custom_call.1} parent=1 // loop_exit
      _
    %1433 = vsyncpa [#allocation3], 1
    %s1434 = scalar_lea.sflag [#allocation3], 1
    %1435 = vsyncpa %s1434, 1

</llo_original>
